<compile_context>
chip_gen: v6e
topology: v6e:2x2x1
jax: 0.10.0
libtpu: 0.0.40
codegen_flags: <defaults>
</compile_context>

<pallas_src>
import functools

import jax
import jax.numpy as jnp
from jax import lax
from jax.experimental import pallas as pl
from jax.experimental.pallas import tpu as pltpu

_BIG = 1e30  # finite sentinel — avoids inf - inf = NaN inside the relu argument


def _triplet_kernel(label_ref, x_ref, out_ref, dp_scr, dn_scr, *,
                    margin, chunk, unroll):
    """One grid step processes P parts.

    label_ref: (P, m)    int32
    x_ref:     (P, m, d) float32
    out_ref:   (P, 4)    float32 — columns [full_mean, hard_mean, mean_dist, full_num]
    dp_scr:    (P, m_pad, m) float32 VMEM — masked positives WITH margin folded in
    dn_scr:    (P, m_pad, m) float32 VMEM — masked negatives
    """
    x = x_ref[...].astype(jnp.float32)                      # (P, m, d)
    lab = label_ref[...]                                    # (P, m)
    P, m, _ = x.shape
    mg = jnp.float32(margin)
    big = jnp.float32(_BIG)
    num_chunks = pl.cdiv(m, chunk)
    m_pad = num_chunks * chunk

    # ---- batch_dist: pairwise euclidean distances, batched over parts (MXU) ----
    sq = jnp.sum(x * x, axis=2)                             # (P, m)
    gram = jnp.einsum('pmd,pkd->pmk', x, x,
                      preferred_element_type=jnp.float32)   # (P, m, m)
    dist2 = sq[:, :, None] + sq[:, None, :] - 2.0 * gram
    dist = jnp.sqrt(jnp.maximum(dist2, 0.0))                # (P, m, m)

    # mean_dist = dist.mean(1).mean(1)  (rows are equal length -> global mean)
    mean_dist = jnp.mean(jnp.mean(dist, axis=2), axis=1, keepdims=True)   # (P, 1)

    # ---- pre-masked distance matrices; margin folded into the positives ----
    same = lab[:, :, None] == lab[:, None, :]               # (P, m, m)
    dpm = jnp.where(same, dist + mg, -big)  # (dist + margin) over positives, else -BIG
    dn = jnp.where(same, big, dist)         # dist over negatives, else +BIG

    # ---- hard triplet loss (reuses the folded matrix: max(dp+margin) - min(dn)) ----
    hard_hp_m = jnp.max(dpm, axis=2)                        # (P, m) = hard_hp + margin
    hard_hn = jnp.min(dn, axis=2)                           # (P, m)
    hard = jnp.maximum(hard_hp_m - hard_hn, 0.0)            # (P, m)
    hard_mean = jnp.mean(hard, axis=1, keepdims=True)       # (P, 1)

    # ---- stage pre-masked matrices in VMEM scratch (padded anchors are inert) ----
    if m_pad == m:
        dp_scr[...] = dpm
        dn_scr[...] = dn
    else:
        # Written every step (scratch is per-core under megacore sharding, so a
        # program_id==0 guard would be unsafe); only hit for non-divisor chunk.
        dp_scr[:, :m, :] = dpm
        dn_scr[:, :m, :] = dn
        dp_scr[:, m:, :] = jnp.full((P, m_pad - m, m), -big, jnp.float32)
        dn_scr[:, m:, :] = jnp.full((P, m_pad - m, m), big, jnp.float32)

    # ---- full triplet loss, chunked over the anchor axis (fused sum + count) ----
    def body(c, carry):
        fsum, fnum = carry
        start = pl.multiple_of(c * chunk, chunk)
        dpc = dp_scr[:, pl.ds(start, chunk), :]             # (P, chunk, m)
        dnc = dn_scr[:, pl.ds(start, chunk), :]             # (P, chunk, m)
        # z[p, j, a, b] = margin + dp[p, j, a] - dn[p, j, b]  (margin pre-folded)
        z = dpc[:, :, :, None] - dnc[:, :, None, :]         # (P, chunk, m, m)
        pos = z > 0.0
        val = jnp.where(pos, z, 0.0)
        s = jnp.sum(jnp.sum(val, axis=3), axis=2)                          # (P, chunk)
        cnt = jnp.sum(jnp.sum(pos.astype(jnp.float32), axis=3), axis=2)    # (P, chunk)
        fsum = fsum + jnp.sum(s, axis=1, keepdims=True)                    # (P, 1)
        fnum = fnum + jnp.sum(cnt, axis=1, keepdims=True)                  # (P, 1)
        return fsum, fnum

    # TODO(synk): for m >= ~512 accumulate the count in int32 (f32 exact to 2^24).
    init = (jnp.zeros((P, 1), jnp.float32), jnp.zeros((P, 1), jnp.float32))
    full_sum, full_num = lax.fori_loop(0, num_chunks, body, init, unroll=unroll)
    full_mean = jnp.where(full_num == 0.0, 0.0,
                          full_sum / jnp.maximum(full_num, 1.0))           # (P, 1)

    # ---- pack the four per-part scalars into a single (P, 4) store ----
    out_ref[...] = jnp.concatenate([full_mean, hard_mean, mean_dist, full_num],
                                   axis=1)


def _pick_chunk(m, P, target_cube_bytes):
    """Largest chunk whose (P, chunk, m, m) f32 cube fits the budget; snapped to
    a divisor of m so the anchor axis never needs sentinel padding."""
    budget = max(1, min(m, target_cube_bytes // max(1, P * m * m * 4)))
    for c in range(int(budget), 0, -1):
        if m % c == 0:
            return c
    return 1


def triplet_loss(feature, label, margin, *, chunk=None, max_parts_per_step=8,
                 target_cube_bytes=4 << 20):
    """feature: (n, m, d) float, label: (n, m) int.
    Returns (full_loss_metric_mean, hard_loss_metric_mean, mean_dist,
    full_loss_num), each shape (n,) float32."""
    n, m, d = feature.shape
    feature = feature.astype(jnp.float32)
    label = label.astype(jnp.int32)

    # Parts per grid step.  n <= 8: one step, block == full dim (sublane-legal).
    # n > 8: pad n up to a multiple of 8 so P = 8 (even steps, 8-sublane tiles).
    if n <= max_parts_per_step:
        P, n_pad = n, n
    else:
        P = max_parts_per_step
        n_pad = ((n + P - 1) // P) * P
        if n_pad != n:
            pad = n_pad - n
            feature = jnp.concatenate(
                [feature, jnp.zeros((pad, m, d), jnp.float32)], axis=0)
            label = jnp.concatenate(
                [label, jnp.zeros((pad, m), jnp.int32)], axis=0)

    if chunk is None:
        chunk = _pick_chunk(m, P, target_cube_bytes)
    chunk = int(max(1, min(chunk, m)))
    num_chunks = pl.cdiv(m, chunk)
    m_pad = num_chunks * chunk

    cube_bytes = P * chunk * m * m * 4
    unroll = bool(num_chunks <= 4 and cube_bytes <= (1 << 20))

    # VMEM budget: double-buffered inputs + staged distance mats + cube temps.
    in_bytes = 2 * (P * m * d * 4 + P * m * 4)               # double-buffered
    scratch_bytes = 2 * P * m_pad * m * 4
    need = in_bytes + scratch_bytes + 4 * cube_bytes + (4 << 20)
    vmem_limit = int(min(max(need, 32 << 20), 48 << 20))     # safe on v5e/v6e/v7x

    kernel = functools.partial(_triplet_kernel, margin=float(margin),
                               chunk=chunk, unroll=unroll)
    out = pl.pallas_call(
        kernel,
        out_shape=jax.ShapeDtypeStruct((n_pad, 4), jnp.float32),
        grid_spec=pltpu.PrefetchScalarGridSpec(
            num_scalar_prefetch=0,
            grid=(n_pad // P,),
            in_specs=[
                pl.BlockSpec((P, m), lambda i: (i, 0)),         # labels
                pl.BlockSpec((P, m, d), lambda i: (i, 0, 0)),   # features
            ],
            out_specs=pl.BlockSpec((P, 4), lambda i: (i, 0)),   # packed scalars
            scratch_shapes=[
                pltpu.VMEM((P, m_pad, m), jnp.float32),  # dp + margin (masked positives)
                pltpu.VMEM((P, m_pad, m), jnp.float32),  # dn (masked negatives)
            ],
        ),
        compiler_params=pltpu.CompilerParams(
            dimension_semantics=("parallel",),                  # parts are independent
            vmem_limit_bytes=vmem_limit),
    )(label, feature)
    out = out[:n]
    return out[:, 0], out[:, 1], out[:, 2], out[:, 3]


def triplet_loss_ref(feature, label, margin):
    """Plain-JAX reference with identical semantics (mask formulation is
    equivalent to torch.masked_select + view for balanced batches).
    NOTE: f32 throughout (PyTorch uses float64 for part of the math)."""
    x = feature.astype(jnp.float32)
    sq = jnp.sum(x * x, axis=2)                                   # (n, m)
    gram = jnp.einsum('nmd,nkd->nmk', x, x)
    dist = jnp.sqrt(jnp.maximum(sq[:, :, None] + sq[:, None, :] - 2.0 * gram, 0.0))
    same = label[:, :, None] == label[:, None, :]
    diff = jnp.logical_not(same)
    mean_dist = dist.mean(axis=(1, 2))
    hard_hp = jnp.max(jnp.where(same, dist, -jnp.inf), axis=2)
    hard_hn = jnp.min(jnp.where(diff, dist, jnp.inf), axis=2)
    hard_mean = jnp.maximum(margin + hard_hp - hard_hn, 0.0).mean(axis=1)
    d3 = dist[:, :, :, None] - dist[:, :, None, :]
    val = jnp.maximum(margin + d3, 0.0)
    mask = jnp.logical_and(same[:, :, :, None], diff[:, :, None, :])
    val = jnp.where(mask, val, 0.0)
    fsum = val.sum(axis=(1, 2, 3))
    fnum = (val > 0).sum(axis=(1, 2, 3)).astype(jnp.float32)
    fmean = jnp.where(fnum == 0, 0.0, fsum / jnp.maximum(fnum, 1.0))
    return fmean, hard_mean, mean_dist, fnum


if __name__ == "__main__":
    margin = 0.2
    key = jax.random.PRNGKey(0)
    k1, k2, k3 = jax.random.split(key, 3)

    # Test 1: n=4 parts, m=8 (2 classes x 4), d=32 — single grid step, P = n.
    n, m, d = 4, 8, 32
    feat1 = jax.random.normal(k1, (n, m, d), dtype=jnp.float32)
    lab1 = jnp.tile(jnp.repeat(jnp.arange(2, dtype=jnp.int32), 4), (n, 1))

    # Test 2: n=6 parts, m=16 (4 classes x 4), d=24, chunk=4 — multi-chunk loop.
    n2, m2, d2 = 6, 16, 24
    feat2 = jax.random.normal(k2, (n2, m2, d2), dtype=jnp.float32)
    lab2 = jnp.tile(jnp.repeat(jnp.arange(4, dtype=jnp.int32), 4), (n2, 1))

    # Test 3: n=10 parts (> 8 -> padded to 16, P=8, 2 grid steps), m=8, d=16.
    n3, m3, d3 = 10, 8, 16
    feat3 = jax.random.normal(k3, (n3, m3, d3), dtype=jnp.float32)
    lab3 = jnp.tile(jnp.repeat(jnp.arange(2, dtype=jnp.int32), 4), (n3, 1))

    ok = True
    for feat, lab, ck in ((feat1, lab1, None), (feat2, lab2, 4), (feat3, lab3, None)):
        outs = triplet_loss(feat, lab, margin, chunk=ck)
        outs = jax.block_until_ready(outs)
        refs = triplet_loss_ref(feat, lab, margin)
        for o, r in zip(outs, refs):
            ok = ok and bool(jnp.allclose(o, r.astype(jnp.float32),
                                          atol=1e-4, rtol=1e-4))
    if not ok:
        raise AssertionError("Pallas result does not match reference")
    print("KERNEL_OK")
</pallas_src>

<mosaic_0001>
module attributes {stable_mosaic.version = 11 : i64} {
  func.func @_triplet_kernel(%arg0: i32, %arg1: memref<4x8xi32, #tpu.memory_space<vmem>>, %arg2: memref<4x8x32xf32, #tpu.memory_space<vmem>>, %arg3: memref<4x4xf32, #tpu.memory_space<vmem>>, %arg4: memref<4x8x8xf32, #tpu.memory_space<vmem>>, %arg5: memref<4x8x8xf32, #tpu.memory_space<vmem>>) attributes {dimension_semantics = [#tpu.dimension_semantics<parallel>], iteration_bounds = array<i64: 1>, scalar_prefetch = 0 : i64, scratch_operands = 2 : i64, tpu.core_type = #tpu.core_type<tc>, window_params = [{transform_indices = @transform_0, window_bounds = array<i64: 4, 8>}, {transform_indices = @transform_1, window_bounds = array<i64: 4, 8, 32>}, {transform_indices = @transform_2, window_bounds = array<i64: 4, 4>}]} {
    %c0 = arith.constant 0 : index
    %c0_0 = arith.constant 0 : index
    %c0_1 = arith.constant 0 : index
    %0 = vector.load %arg2[%c0, %c0_0, %c0_1] : memref<4x8x32xf32, #tpu.memory_space<vmem>>, vector<4x8x32xf32>
    %c0_2 = arith.constant 0 : index
    %c0_3 = arith.constant 0 : index
    %1 = vector.load %arg1[%c0_2, %c0_3] : memref<4x8xi32, #tpu.memory_space<vmem>>, vector<4x8xi32>
    %2 = arith.mulf %0, %0 : vector<4x8x32xf32>
    %cst = arith.constant dense<0.000000e+00> : vector<4x8xf32>
    %3 = vector.multi_reduction <add>, %2, %cst [2] : vector<4x8x32xf32> to vector<4x8xf32>
    "tpu.trace_start"() <{level = 10 : i32, message = "pmd,pkd->pmk"}> : () -> ()
    %cst_4 = arith.constant dense<0.000000e+00> : vector<4x8x8xf32>
    %4 = tpu.matmul %0, %0, %cst_4 {dimension_numbers = #tpu.dot_dimension_numbers<[2], [2], [1], [1], [0, 0, 0, 1, 1, 1], [0], [0]>} : vector<4x8x32xf32>, vector<4x8x32xf32>, vector<4x8x8xf32> -> vector<4x8x8xf32>
    "tpu.trace_stop"() : () -> ()
    %5 = vector.shape_cast %3 : vector<4x8xf32> to vector<4x8x1xf32>
    %6 = vector.shape_cast %3 : vector<4x8xf32> to vector<4x1x8xf32>
    %7 = vector.broadcast %5 : vector<4x8x1xf32> to vector<4x8x8xf32>
    %8 = vector.broadcast %6 : vector<4x1x8xf32> to vector<4x8x8xf32>
    %9 = arith.addf %7, %8 : vector<4x8x8xf32>
    %cst_5 = arith.constant 2.000000e+00 : f32
    %10 = vector.broadcast %cst_5 : f32 to vector<4x8x8xf32>
    %11 = arith.mulf %10, %4 : vector<4x8x8xf32>
    %12 = arith.subf %9, %11 : vector<4x8x8xf32>
    %cst_6 = arith.constant 0.000000e+00 : f32
    %13 = vector.broadcast %cst_6 : f32 to vector<4x8x8xf32>
    %14 = arith.maximumf %12, %13 : vector<4x8x8xf32>
    %15 = math.sqrt %14 : vector<4x8x8xf32>
    %cst_7 = arith.constant dense<0.000000e+00> : vector<4x8xf32>
    %16 = vector.multi_reduction <add>, %15, %cst_7 [2] : vector<4x8x8xf32> to vector<4x8xf32>
    %cst_8 = arith.constant 8.000000e+00 : f32
    %17 = vector.broadcast %cst_8 : f32 to vector<4x8xf32>
    %18 = arith.divf %16, %17 : vector<4x8xf32>
    %cst_9 = arith.constant dense<0.000000e+00> : vector<4xf32>
    %19 = vector.multi_reduction <add>, %18, %cst_9 [1] : vector<4x8xf32> to vector<4xf32>
    %20 = vector.shape_cast %19 : vector<4xf32> to vector<4x1xf32>
    %cst_10 = arith.constant 8.000000e+00 : f32
    %21 = vector.broadcast %cst_10 : f32 to vector<4x1xf32>
    %22 = arith.divf %20, %21 : vector<4x1xf32>
    %23 = vector.shape_cast %1 : vector<4x8xi32> to vector<4x8x1xi32>
    %24 = vector.shape_cast %1 : vector<4x8xi32> to vector<4x1x8xi32>
    %25 = vector.broadcast %23 : vector<4x8x1xi32> to vector<4x8x8xi32>
    %26 = vector.broadcast %24 : vector<4x1x8xi32> to vector<4x8x8xi32>
    %27 = arith.cmpi eq, %25, %26 : vector<4x8x8xi32>
    %cst_11 = arith.constant 2.000000e-01 : f32
    %28 = vector.broadcast %cst_11 : f32 to vector<4x8x8xf32>
    %29 = arith.addf %15, %28 : vector<4x8x8xf32>
    %cst_12 = arith.constant 0.000000e+00 : f32
    %cst_13 = arith.constant 1.000000e+30 : f32
    %30 = arith.subf %cst_12, %cst_13 : f32
    %31 = vector.broadcast %30 : f32 to vector<4x8x8xf32>
    %32 = arith.select %27, %29, %31 : vector<4x8x8xi1>, vector<4x8x8xf32>
    %cst_14 = arith.constant 1.000000e+30 : f32
    %33 = vector.broadcast %cst_14 : f32 to vector<4x8x8xf32>
    %34 = arith.select %27, %33, %15 : vector<4x8x8xi1>, vector<4x8x8xf32>
    %cst_15 = arith.constant dense<0xFF800000> : vector<4x8xf32>
    %35 = vector.multi_reduction <maximumf>, %32, %cst_15 [2] : vector<4x8x8xf32> to vector<4x8xf32>
    %cst_16 = arith.constant dense<0x7F800000> : vector<4x8xf32>
    %36 = vector.multi_reduction <minimumf>, %34, %cst_16 [2] : vector<4x8x8xf32> to vector<4x8xf32>
    %37 = arith.subf %35, %36 : vector<4x8xf32>
    %cst_17 = arith.constant 0.000000e+00 : f32
    %38 = vector.broadcast %cst_17 : f32 to vector<4x8xf32>
    %39 = arith.maximumf %37, %38 : vector<4x8xf32>
    %cst_18 = arith.constant dense<0.000000e+00> : vector<4xf32>
    %40 = vector.multi_reduction <add>, %39, %cst_18 [1] : vector<4x8xf32> to vector<4xf32>
    %41 = vector.shape_cast %40 : vector<4xf32> to vector<4x1xf32>
    %cst_19 = arith.constant 8.000000e+00 : f32
    %42 = vector.broadcast %cst_19 : f32 to vector<4x1xf32>
    %43 = arith.divf %41, %42 : vector<4x1xf32>
    %c0_20 = arith.constant 0 : index
    %c0_21 = arith.constant 0 : index
    %c0_22 = arith.constant 0 : index
    %44 = vector.load %arg4[%c0_20, %c0_21, %c0_22] : memref<4x8x8xf32, #tpu.memory_space<vmem>>, vector<4x8x8xf32>
    tpu.vector_store %arg4[%c0_20, %c0_21, %c0_22], %32 {strides = array<i32>} : memref<4x8x8xf32, #tpu.memory_space<vmem>>, vector<4x8x8xf32>,
    %c0_23 = arith.constant 0 : index
    %c0_24 = arith.constant 0 : index
    %c0_25 = arith.constant 0 : index
    %45 = vector.load %arg5[%c0_23, %c0_24, %c0_25] : memref<4x8x8xf32, #tpu.memory_space<vmem>>, vector<4x8x8xf32>
    tpu.vector_store %arg5[%c0_23, %c0_24, %c0_25], %34 {strides = array<i32>} : memref<4x8x8xf32, #tpu.memory_space<vmem>>, vector<4x8x8xf32>,
    %cst_26 = arith.constant 0.000000e+00 : f32
    %46 = vector.broadcast %cst_26 : f32 to vector<4x1xf32>
    %cst_27 = arith.constant 0.000000e+00 : f32
    %47 = vector.broadcast %cst_27 : f32 to vector<4x1xf32>
    %c0_i32 = arith.constant 0 : i32
    %c8_i32 = arith.constant 8 : i32
    %48 = arith.muli %c0_i32, %c8_i32 : i32
    %49 = tpu.assume_multiple %48, 8 : i32
    %c0_28 = arith.constant 0 : index
    %50 = arith.index_cast %49 : i32 to index
    %c0_29 = arith.constant 0 : index
    %51 = vector.load %arg4[%c0_28, %50, %c0_29] : memref<4x8x8xf32, #tpu.memory_space<vmem>>, vector<4x8x8xf32>
    %c0_30 = arith.constant 0 : index
    %52 = arith.index_cast %49 : i32 to index
    %c0_31 = arith.constant 0 : index
    %53 = vector.load %arg5[%c0_30, %52, %c0_31] : memref<4x8x8xf32, #tpu.memory_space<vmem>>, vector<4x8x8xf32>
    %54 = vector.shape_cast %51 : vector<4x8x8xf32> to vector<4x8x8x1xf32>
    %55 = vector.shape_cast %53 : vector<4x8x8xf32> to vector<4x8x1x8xf32>
    %56 = vector.broadcast %54 : vector<4x8x8x1xf32> to vector<4x8x8x8xf32>
    %57 = vector.broadcast %55 : vector<4x8x1x8xf32> to vector<4x8x8x8xf32>
    %58 = arith.subf %56, %57 : vector<4x8x8x8xf32>
    %cst_32 = arith.constant 0.000000e+00 : f32
    %59 = vector.broadcast %cst_32 : f32 to vector<4x8x8x8xf32>
    %60 = arith.cmpf ogt, %58, %59 : vector<4x8x8x8xf32>
    %cst_33 = arith.constant 0.000000e+00 : f32
    %61 = vector.broadcast %cst_33 : f32 to vector<4x8x8x8xf32>
    %62 = arith.select %60, %58, %61 : vector<4x8x8x8xi1>, vector<4x8x8x8xf32>
    %cst_34 = arith.constant dense<0.000000e+00> : vector<4x8x8xf32>
    %63 = vector.multi_reduction <add>, %62, %cst_34 [3] : vector<4x8x8x8xf32> to vector<4x8x8xf32>
    %cst_35 = arith.constant dense<0.000000e+00> : vector<4x8xf32>
    %64 = vector.multi_reduction <add>, %63, %cst_35 [2] : vector<4x8x8xf32> to vector<4x8xf32>
    %65 = arith.extui %60 : vector<4x8x8x8xi1> to vector<4x8x8x8xi32>
    %66 = arith.sitofp %65 : vector<4x8x8x8xi32> to vector<4x8x8x8xf32>
    %cst_36 = arith.constant dense<0.000000e+00> : vector<4x8x8xf32>
    %67 = vector.multi_reduction <add>, %66, %cst_36 [3] : vector<4x8x8x8xf32> to vector<4x8x8xf32>
    %cst_37 = arith.constant dense<0.000000e+00> : vector<4x8xf32>
    %68 = vector.multi_reduction <add>, %67, %cst_37 [2] : vector<4x8x8xf32> to vector<4x8xf32>
    %cst_38 = arith.constant dense<0.000000e+00> : vector<4xf32>
    %69 = vector.multi_reduction <add>, %64, %cst_38 [1] : vector<4x8xf32> to vector<4xf32>
    %70 = vector.shape_cast %69 : vector<4xf32> to vector<4x1xf32>
    %71 = arith.addf %46, %70 : vector<4x1xf32>
    %cst_39 = arith.constant dense<0.000000e+00> : vector<4xf32>
    %72 = vector.multi_reduction <add>, %68, %cst_39 [1] : vector<4x8xf32> to vector<4xf32>
    %73 = vector.shape_cast %72 : vector<4xf32> to vector<4x1xf32>
    %74 = arith.addf %47, %73 : vector<4x1xf32>
    %c1_i32 = arith.constant 1 : i32
    %cst_40 = arith.constant 0.000000e+00 : f32
    %75 = vector.broadcast %cst_40 : f32 to vector<4x1xf32>
    %76 = arith.cmpf oeq, %74, %75 : vector<4x1xf32>
    %cst_41 = arith.constant 1.000000e+00 : f32
    %77 = vector.broadcast %cst_41 : f32 to vector<4x1xf32>
    %78 = arith.maximumf %74, %77 : vector<4x1xf32>
    %79 = arith.divf %71, %78 : vector<4x1xf32>
    %cst_42 = arith.constant 0.000000e+00 : f32
    %80 = vector.broadcast %cst_42 : f32 to vector<4x1xf32>
    %81 = arith.select %76, %80, %79 : vector<4x1xi1>, vector<4x1xf32>
    %82 = tpu.concatenate %81, %43, %22, %74 in 1 : vector<4x1xf32>, vector<4x1xf32>, vector<4x1xf32>, vector<4x1xf32> -> vector<4x4xf32>
    %c0_43 = arith.constant 0 : index
    %c0_44 = arith.constant 0 : index
    %83 = vector.load %arg3[%c0_43, %c0_44] : memref<4x4xf32, #tpu.memory_space<vmem>>, vector<4x4xf32>
    tpu.vector_store %arg3[%c0_43, %c0_44], %82 {strides = array<i32>} : memref<4x4xf32, #tpu.memory_space<vmem>>, vector<4x4xf32>,
    return
  }
  func.func @transform_0(%arg0: i32) -> (i32, i32) {
    %c0_i32 = arith.constant 0 : i32
    %c0_i32_0 = arith.constant 0 : i32
    return %arg0, %c0_i32 : i32, i32
  }
  func.func @transform_1(%arg0: i32) -> (i32, i32, i32) {
    %c0_i32 = arith.constant 0 : i32
    %c0_i32_0 = arith.constant 0 : i32
    %c0_i32_1 = arith.constant 0 : i32
    return %arg0, %c0_i32, %c0_i32_0 : i32, i32, i32
  }
  func.func @transform_2(%arg0: i32) -> (i32, i32) {
    %c0_i32 = arith.constant 0 : i32
    %c0_i32_0 = arith.constant 0 : i32
    return %arg0, %c0_i32 : i32, i32
  }
}

</mosaic_0001>

<llo_original>
// kernel: tpu_custom_call.1
$region0: #{tpu_custom_call.1}
  #allocation0 [shape = 'u32[]', space=smem, size = 0x4, offset = 0x4, fixed_abs, tag = 'smem constant byte address 0x4 - core index']
  #allocation1 [shape = 'u32[144,128]{1,0:T(1,128)}', space=vmem, size = 0x12000, scoped, tag = 'internal scratch']
  #allocation2 [shape = 'f32[4,8,8]{2,1,0:T(8,128)}', space=vmem, size = 0x4000, scoped, tag = 'scratch operand']
  #allocation3 [shape = 'f32[4,8,8]{2,1,0:T(8,128)}', space=vmem, size = 0x4000, scoped, tag = 'scratch operand']
  %s0 = inlined_call_operand.hbm [shape: s32[4,8], index: 0, kind: input, shape index: {}]
  %s1 = inlined_call_operand.hbm [shape: f32[4,8,32], index: 1, kind: input, shape index: {}]
  %s2 = inlined_call_operand.hbm [shape: f32[4,4], index: 2, kind: output, shape index: {}]
  %s3 = sld [smem:[#allocation0]]
  $region26: #{tpu_custom_call.1} parent=0
    _
  %s5 = ssub.s32 1, %s3
  %s6 = scalar_select 0, %s5, %s3
  $region1: #{tpu_custom_call.1} parent=0
    #allocation4 [shape = 'u8[2048]{0}', space=vmem, size = 0x800, scoped, tag = 'input window, operand 0, single buffered']
    #allocation5 [shape = 's32[1]{0}', space=sflag, size = 0x4, scoped, tag = 'scoped memory for tpu_custom_call.1']
    #allocation6 [shape = 's32[1]{0}', space=sflag, size = 0x4, scoped, tag = 'scoped memory for tpu_custom_call.1']
    #allocation7 [shape = 'u8[16384]{0}', space=vmem, size = 0x4000, scoped, tag = 'input window, operand 1, single buffered']
    #allocation8 [shape = 's32[1]{0}', space=sflag, size = 0x4, scoped, tag = 'scoped memory for tpu_custom_call.1']
    #allocation9 [shape = 'u8[2048]{0}', space=vmem, size = 0x800, scoped, tag = 'output window, operand 0, single buffered']
    %7 = vsyncpa [#allocation5], 0
    %8 = vsyncpa [#allocation8], 0
    %9 = vsyncpa [#allocation6], 0
    // Predicated region
    $region2: #{tpu_custom_call.1} parent=1 // pred_check
      _
    $region3: #{tpu_custom_call.1} parent=1 // pred_check_branch
      %11 = sbr.rel (0) target = $region5
    $region4: #{tpu_custom_call.1} parent=1 // pred_region
      %s13 = ssub.s32 64, 64
      %14 = vsyncadd [#allocation5], %s13
      %s16 = sshll.u32 [#allocation4], 4
      %s17 = int_to_ptr.vmem [resolvable:$true] %s16
      %19 = dma.hbm_to_vmem [thread:$0]  %s0, 64, %s17, [#allocation5]
    $region5: #{tpu_custom_call.1} parent=1 // pred_fallthru
      _
    // Predicated region
    $region6: #{tpu_custom_call.1} parent=1 // pred_check
      _
    $region7: #{tpu_custom_call.1} parent=1 // pred_check_branch
      %21 = sbr.rel (0) target = $region9
    $region8: #{tpu_custom_call.1} parent=1 // pred_region
      %s23 = ssub.s32 512, 512
      %24 = vsyncadd [#allocation8], %s23
      %s25 = sshll.u32 [#allocation7], 4
      %s26 = int_to_ptr.vmem [resolvable:$true] %s25
      %31 = dma.hbm_to_vmem [thread:$0]  %s1, 512, %s26, [#allocation8], 128, 128, 8
    $region9: #{tpu_custom_call.1} parent=1 // pred_fallthru
      _
    // Predicated region
    $region10: #{tpu_custom_call.1} parent=1 // pred_check
      _
    $region11: #{tpu_custom_call.1} parent=1 // pred_check_branch
      %33 = sbr.rel (0) target = $region13
    $region12: #{tpu_custom_call.1} parent=1 // pred_region
      %34 = dma.done [#allocation5], 64
    $region13: #{tpu_custom_call.1} parent=1 // pred_fallthru
      _
    // Predicated region
    $region14: #{tpu_custom_call.1} parent=1 // pred_check
      _
    $region15: #{tpu_custom_call.1} parent=1 // pred_check_branch
      %36 = sbr.rel (0) target = $region17
    $region16: #{tpu_custom_call.1} parent=1 // pred_region
      %37 = dma.done [#allocation8], 512
    $region17: #{tpu_custom_call.1} parent=1 // pred_fallthru
      _
    %v38 = vld [vmem:[#allocation7] sm:$0xff]
    %v39 = vld [vmem:[#allocation7 + $0x8] sm:$0xff]
    %v40 = vld [vmem:[#allocation7 + $0x10] sm:$0xff]
    %v41 = vld [vmem:[#allocation7 + $0x18] sm:$0xff]
    %v42 = vld [vmem:[#allocation4] sm:$0xf]
    %v43 = vmul.f32 %v38, %v38
    %v44 = vmul.f32 %v39, %v39
    %v45 = vmul.f32 %v40, %v40
    %v46 = vmul.f32 %v41, %v41
    %vm47 = vcmask 261120
    %v48 = vsel %vm47, %v43, 0.0
    %49 = vadd.xlane.f32.xlu0 %v48
    %v50 = vpop.xlane.xlu0 %49
    %v51 = vsel %vm47, %v44, 0.0
    %52 = vadd.xlane.f32.xlu0 %v51
    %v53 = vpop.xlane.xlu0 %52
    %v54 = vsel %vm47, %v45, 0.0
    %55 = vadd.xlane.f32.xlu0 %v54
    %v56 = vpop.xlane.xlu0 %55
    %v57 = vsel %vm47, %v46, 0.0
    %58 = vadd.xlane.f32.xlu0 %v57
    %v59 = vpop.xlane.xlu0 %58
    %v61 = vsel %vm47, %v38, 0
    %63 = vmatprep.subr.mxu0 0.0
    %64 = vmatpush1.xpose.msra.mxu0 0.0
    %65 = vmatprep.subr.mxu0 0.0
    %66 = vmatpush1.xpose.msra.mxu0 0.0
    %67 = vmatprep.subr.mxu0 0.0
    %68 = vmatpush1.xpose.msra.mxu0 0.0
    %69 = vmatprep.subr.mxu0 0.0
    %70 = vmatpush1.xpose.msra.mxu0 0.0
    %71 = vmatprep.subr.mxu0 0.0
    %72 = vmatpush1.xpose.msra.mxu0 0.0
    %73 = vmatprep.subr.mxu0 0.0
    %74 = vmatpush1.xpose.msra.mxu0 0.0
    %75 = vmatprep.subr.mxu0 0.0
    %76 = vmatpush1.xpose.msra.mxu0 0.0
    %77 = vmatprep.subr.mxu0 0.0
    %78 = vmatpush1.xpose.msra.mxu0 0.0
    %79 = vmatprep.subr.mxu0 0.0
    %80 = vmatpush1.xpose.msra.mxu0 0.0
    %81 = vmatprep.subr.mxu0 0.0
    %82 = vmatpush1.xpose.msra.mxu0 0.0
    %83 = vmatprep.subr.mxu0 0.0
    %84 = vmatpush1.xpose.msra.mxu0 0.0
    %85 = vmatprep.subr.mxu0 0.0
    %86 = vmatpush1.xpose.msra.mxu0 0.0
    %87 = vmatprep.subr.mxu0 0.0
    %88 = vmatpush1.xpose.msra.mxu0 0.0
    %89 = vmatprep.subr.mxu0 0.0
    %90 = vmatpush1.xpose.msra.mxu0 0.0
    %91 = vmatprep.subr.mxu0 0.0
    %92 = vmatpush1.xpose.msra.mxu0 0.0
    %93 = vmatprep.subr.mxu0 0.0
    %94 = vmatpush1.xpose.msra.mxu0 %v61
    %95 = vmatprep.subr.mxu0 0.0
    %96 = vmatpush2.xpose.msra.mxu0 0.0
    %97 = vmatprep.subr.mxu0 0.0
    %98 = vmatpush2.xpose.msra.mxu0 0.0
    %99 = vmatprep.subr.mxu0 0.0
    %100 = vmatpush2.xpose.msra.mxu0 0.0
    %101 = vmatprep.subr.mxu0 0.0
    %102 = vmatpush2.xpose.msra.mxu0 0.0
    %103 = vmatprep.subr.mxu0 0.0
    %104 = vmatpush2.xpose.msra.mxu0 0.0
    %105 = vmatprep.subr.mxu0 0.0
    %106 = vmatpush2.xpose.msra.mxu0 0.0
    %107 = vmatprep.subr.mxu0 0.0
    %108 = vmatpush2.xpose.msra.mxu0 0.0
    %109 = vmatprep.subr.mxu0 0.0
    %110 = vmatpush2.xpose.msra.mxu0 0.0
    %111 = vmatprep.subr.mxu0 0.0
    %112 = vmatpush2.xpose.msra.mxu0 0.0
    %113 = vmatprep.subr.mxu0 0.0
    %114 = vmatpush2.xpose.msra.mxu0 0.0
    %115 = vmatprep.subr.mxu0 0.0
    %116 = vmatpush2.xpose.msra.mxu0 0.0
    %117 = vmatprep.subr.mxu0 0.0
    %118 = vmatpush2.xpose.msra.mxu0 0.0
    %119 = vmatprep.subr.mxu0 0.0
    %120 = vmatpush2.xpose.msra.mxu0 0.0
    %121 = vmatprep.subr.mxu0 0.0
    %122 = vmatpush2.xpose.msra.mxu0 0.0
    %123 = vmatprep.subr.mxu0 0.0
    %124 = vmatpush2.xpose.msra.mxu0 0.0
    %125 = vmatprep.subr.mxu0 0.0
    %126 = vmatpush2.xpose.msra.mxu0 0.0
    %127 = vmatprep.mubr.f32.mxu0 0.0
    %128 = vmatmul.mubr.f32.gmra.mxu0 %v61
    %v129 = vpop.f32.mrf.mxu0
    %v130 = vadd.f32 0.0, %v129
    %v131 = vpop.f32.mrf.mxu0
    %132 = vdwg.mxu0
    %v134 = vsel %vm47, %v39, 0
    %136 = vmatprep.subr.mxu0 0.0
    %137 = vmatpush1.xpose.msra.mxu0 0.0
    %138 = vmatprep.subr.mxu0 0.0
    %139 = vmatpush1.xpose.msra.mxu0 0.0
    %140 = vmatprep.subr.mxu0 0.0
    %141 = vmatpush1.xpose.msra.mxu0 0.0
    %142 = vmatprep.subr.mxu0 0.0
    %143 = vmatpush1.xpose.msra.mxu0 0.0
    %144 = vmatprep.subr.mxu0 0.0
    %145 = vmatpush1.xpose.msra.mxu0 0.0
    %146 = vmatprep.subr.mxu0 0.0
    %147 = vmatpush1.xpose.msra.mxu0 0.0
    %148 = vmatprep.subr.mxu0 0.0
    %149 = vmatpush1.xpose.msra.mxu0 0.0
    %150 = vmatprep.subr.mxu0 0.0
    %151 = vmatpush1.xpose.msra.mxu0 0.0
    %152 = vmatprep.subr.mxu0 0.0
    %153 = vmatpush1.xpose.msra.mxu0 0.0
    %154 = vmatprep.subr.mxu0 0.0
    %155 = vmatpush1.xpose.msra.mxu0 0.0
    %156 = vmatprep.subr.mxu0 0.0
    %157 = vmatpush1.xpose.msra.mxu0 0.0
    %158 = vmatprep.subr.mxu0 0.0
    %159 = vmatpush1.xpose.msra.mxu0 0.0
    %160 = vmatprep.subr.mxu0 0.0
    %161 = vmatpush1.xpose.msra.mxu0 0.0
    %162 = vmatprep.subr.mxu0 0.0
    %163 = vmatpush1.xpose.msra.mxu0 0.0
    %164 = vmatprep.subr.mxu0 0.0
    %165 = vmatpush1.xpose.msra.mxu0 0.0
    %166 = vmatprep.subr.mxu0 0.0
    %167 = vmatpush1.xpose.msra.mxu0 %v134
    %168 = vmatprep.subr.mxu0 0.0
    %169 = vmatpush2.xpose.msra.mxu0 0.0
    %170 = vmatprep.subr.mxu0 0.0
    %171 = vmatpush2.xpose.msra.mxu0 0.0
    %172 = vmatprep.subr.mxu0 0.0
    %173 = vmatpush2.xpose.msra.mxu0 0.0
    %174 = vmatprep.subr.mxu0 0.0
    %175 = vmatpush2.xpose.msra.mxu0 0.0
    %176 = vmatprep.subr.mxu0 0.0
    %177 = vmatpush2.xpose.msra.mxu0 0.0
    %178 = vmatprep.subr.mxu0 0.0
    %179 = vmatpush2.xpose.msra.mxu0 0.0
    %180 = vmatprep.subr.mxu0 0.0
    %181 = vmatpush2.xpose.msra.mxu0 0.0
    %182 = vmatprep.subr.mxu0 0.0
    %183 = vmatpush2.xpose.msra.mxu0 0.0
    %184 = vmatprep.subr.mxu0 0.0
    %185 = vmatpush2.xpose.msra.mxu0 0.0
    %186 = vmatprep.subr.mxu0 0.0
    %187 = vmatpush2.xpose.msra.mxu0 0.0
    %188 = vmatprep.subr.mxu0 0.0
    %189 = vmatpush2.xpose.msra.mxu0 0.0
    %190 = vmatprep.subr.mxu0 0.0
    %191 = vmatpush2.xpose.msra.mxu0 0.0
    %192 = vmatprep.subr.mxu0 0.0
    %193 = vmatpush2.xpose.msra.mxu0 0.0
    %194 = vmatprep.subr.mxu0 0.0
    %195 = vmatpush2.xpose.msra.mxu0 0.0
    %196 = vmatprep.subr.mxu0 0.0
    %197 = vmatpush2.xpose.msra.mxu0 0.0
    %198 = vmatprep.subr.mxu0 0.0
    %199 = vmatpush2.xpose.msra.mxu0 0.0
    %200 = vmatprep.mubr.f32.mxu0 0.0
    %201 = vmatmul.mubr.f32.gmra.mxu0 %v134
    %v202 = vpop.f32.mrf.mxu0
    %v203 = vadd.f32 0.0, %v202
    %v204 = vpop.f32.mrf.mxu0
    %205 = vdwg.mxu0
    %v207 = vsel %vm47, %v40, 0
    %209 = vmatprep.subr.mxu0 0.0
    %210 = vmatpush1.xpose.msra.mxu0 0.0
    %211 = vmatprep.subr.mxu0 0.0
    %212 = vmatpush1.xpose.msra.mxu0 0.0
    %213 = vmatprep.subr.mxu0 0.0
    %214 = vmatpush1.xpose.msra.mxu0 0.0
    %215 = vmatprep.subr.mxu0 0.0
    %216 = vmatpush1.xpose.msra.mxu0 0.0
    %217 = vmatprep.subr.mxu0 0.0
    %218 = vmatpush1.xpose.msra.mxu0 0.0
    %219 = vmatprep.subr.mxu0 0.0
    %220 = vmatpush1.xpose.msra.mxu0 0.0
    %221 = vmatprep.subr.mxu0 0.0
    %222 = vmatpush1.xpose.msra.mxu0 0.0
    %223 = vmatprep.subr.mxu0 0.0
    %224 = vmatpush1.xpose.msra.mxu0 0.0
    %225 = vmatprep.subr.mxu0 0.0
    %226 = vmatpush1.xpose.msra.mxu0 0.0
    %227 = vmatprep.subr.mxu0 0.0
    %228 = vmatpush1.xpose.msra.mxu0 0.0
    %229 = vmatprep.subr.mxu0 0.0
    %230 = vmatpush1.xpose.msra.mxu0 0.0
    %231 = vmatprep.subr.mxu0 0.0
    %232 = vmatpush1.xpose.msra.mxu0 0.0
    %233 = vmatprep.subr.mxu0 0.0
    %234 = vmatpush1.xpose.msra.mxu0 0.0
    %235 = vmatprep.subr.mxu0 0.0
    %236 = vmatpush1.xpose.msra.mxu0 0.0
    %237 = vmatprep.subr.mxu0 0.0
    %238 = vmatpush1.xpose.msra.mxu0 0.0
    %239 = vmatprep.subr.mxu0 0.0
    %240 = vmatpush1.xpose.msra.mxu0 %v207
    %241 = vmatprep.subr.mxu0 0.0
    %242 = vmatpush2.xpose.msra.mxu0 0.0
    %243 = vmatprep.subr.mxu0 0.0
    %244 = vmatpush2.xpose.msra.mxu0 0.0
    %245 = vmatprep.subr.mxu0 0.0
    %246 = vmatpush2.xpose.msra.mxu0 0.0
    %247 = vmatprep.subr.mxu0 0.0
    %248 = vmatpush2.xpose.msra.mxu0 0.0
    %249 = vmatprep.subr.mxu0 0.0
    %250 = vmatpush2.xpose.msra.mxu0 0.0
    %251 = vmatprep.subr.mxu0 0.0
    %252 = vmatpush2.xpose.msra.mxu0 0.0
    %253 = vmatprep.subr.mxu0 0.0
    %254 = vmatpush2.xpose.msra.mxu0 0.0
    %255 = vmatprep.subr.mxu0 0.0
    %256 = vmatpush2.xpose.msra.mxu0 0.0
    %257 = vmatprep.subr.mxu0 0.0
    %258 = vmatpush2.xpose.msra.mxu0 0.0
    %259 = vmatprep.subr.mxu0 0.0
    %260 = vmatpush2.xpose.msra.mxu0 0.0
    %261 = vmatprep.subr.mxu0 0.0
    %262 = vmatpush2.xpose.msra.mxu0 0.0
    %263 = vmatprep.subr.mxu0 0.0
    %264 = vmatpush2.xpose.msra.mxu0 0.0
    %265 = vmatprep.subr.mxu0 0.0
    %266 = vmatpush2.xpose.msra.mxu0 0.0
    %267 = vmatprep.subr.mxu0 0.0
    %268 = vmatpush2.xpose.msra.mxu0 0.0
    %269 = vmatprep.subr.mxu0 0.0
    %270 = vmatpush2.xpose.msra.mxu0 0.0
    %271 = vmatprep.subr.mxu0 0.0
    %272 = vmatpush2.xpose.msra.mxu0 0.0
    %273 = vmatprep.mubr.f32.mxu0 0.0
    %274 = vmatmul.mubr.f32.gmra.mxu0 %v207
    %v275 = vpop.f32.mrf.mxu0
    %v276 = vadd.f32 0.0, %v275
    %v277 = vpop.f32.mrf.mxu0
    %278 = vdwg.mxu0
    %v280 = vsel %vm47, %v41, 0
    %282 = vmatprep.subr.mxu0 0.0
    %283 = vmatpush1.xpose.msra.mxu0 0.0
    %284 = vmatprep.subr.mxu0 0.0
    %285 = vmatpush1.xpose.msra.mxu0 0.0
    %286 = vmatprep.subr.mxu0 0.0
    %287 = vmatpush1.xpose.msra.mxu0 0.0
    %288 = vmatprep.subr.mxu0 0.0
    %289 = vmatpush1.xpose.msra.mxu0 0.0
    %290 = vmatprep.subr.mxu0 0.0
    %291 = vmatpush1.xpose.msra.mxu0 0.0
    %292 = vmatprep.subr.mxu0 0.0
    %293 = vmatpush1.xpose.msra.mxu0 0.0
    %294 = vmatprep.subr.mxu0 0.0
    %295 = vmatpush1.xpose.msra.mxu0 0.0
    %296 = vmatprep.subr.mxu0 0.0
    %297 = vmatpush1.xpose.msra.mxu0 0.0
    %298 = vmatprep.subr.mxu0 0.0
    %299 = vmatpush1.xpose.msra.mxu0 0.0
    %300 = vmatprep.subr.mxu0 0.0
    %301 = vmatpush1.xpose.msra.mxu0 0.0
    %302 = vmatprep.subr.mxu0 0.0
    %303 = vmatpush1.xpose.msra.mxu0 0.0
    %304 = vmatprep.subr.mxu0 0.0
    %305 = vmatpush1.xpose.msra.mxu0 0.0
    %306 = vmatprep.subr.mxu0 0.0
    %307 = vmatpush1.xpose.msra.mxu0 0.0
    %308 = vmatprep.subr.mxu0 0.0
    %309 = vmatpush1.xpose.msra.mxu0 0.0
    %310 = vmatprep.subr.mxu0 0.0
    %311 = vmatpush1.xpose.msra.mxu0 0.0
    %312 = vmatprep.subr.mxu0 0.0
    %313 = vmatpush1.xpose.msra.mxu0 %v280
    %314 = vmatprep.subr.mxu0 0.0
    %315 = vmatpush2.xpose.msra.mxu0 0.0
    %316 = vmatprep.subr.mxu0 0.0
    %317 = vmatpush2.xpose.msra.mxu0 0.0
    %318 = vmatprep.subr.mxu0 0.0
    %319 = vmatpush2.xpose.msra.mxu0 0.0
    %320 = vmatprep.subr.mxu0 0.0
    %321 = vmatpush2.xpose.msra.mxu0 0.0
    %322 = vmatprep.subr.mxu0 0.0
    %323 = vmatpush2.xpose.msra.mxu0 0.0
    %324 = vmatprep.subr.mxu0 0.0
    %325 = vmatpush2.xpose.msra.mxu0 0.0
    %326 = vmatprep.subr.mxu0 0.0
    %327 = vmatpush2.xpose.msra.mxu0 0.0
    %328 = vmatprep.subr.mxu0 0.0
    %329 = vmatpush2.xpose.msra.mxu0 0.0
    %330 = vmatprep.subr.mxu0 0.0
    %331 = vmatpush2.xpose.msra.mxu0 0.0
    %332 = vmatprep.subr.mxu0 0.0
    %333 = vmatpush2.xpose.msra.mxu0 0.0
    %334 = vmatprep.subr.mxu0 0.0
    %335 = vmatpush2.xpose.msra.mxu0 0.0
    %336 = vmatprep.subr.mxu0 0.0
    %337 = vmatpush2.xpose.msra.mxu0 0.0
    %338 = vmatprep.subr.mxu0 0.0
    %339 = vmatpush2.xpose.msra.mxu0 0.0
    %340 = vmatprep.subr.mxu0 0.0
    %341 = vmatpush2.xpose.msra.mxu0 0.0
    %342 = vmatprep.subr.mxu0 0.0
    %343 = vmatpush2.xpose.msra.mxu0 0.0
    %344 = vmatprep.subr.mxu0 0.0
    %345 = vmatpush2.xpose.msra.mxu0 0.0
    %346 = vmatprep.mubr.f32.mxu0 0.0
    %347 = vmatmul.mubr.f32.gmra.mxu0 %v280
    %v348 = vpop.f32.mrf.mxu0
    %v349 = vadd.f32 0.0, %v348
    %v350 = vpop.f32.mrf.mxu0
    %351 = vdwg.mxu0
    %v356 = vlaneseq
    %v357 = vand.u32 %v356, 127
    %v358 = vlaneseq
    %v359 = vshrl.u32 %v358, 7
    %v360 = vsub.s32 %v357, %v359
    %v361 = vrot.slane %v50, %v360
    %v362 = vlaneseq
    %v363 = vshrl.u32 %v362, 7
    %v364 = vsub.s32 %v357, %v363
    %v365 = vrot.slane %v53, %v364
    %v366 = vlaneseq
    %v367 = vshrl.u32 %v366, 7
    %v368 = vsub.s32 %v357, %v367
    %v369 = vrot.slane %v56, %v368
    %v370 = vlaneseq
    %v371 = vshrl.u32 %v370, 7
    %v372 = vsub.s32 %v357, %v371
    %v373 = vrot.slane %v59, %v372
    %vm374 = vcmask 1041409
    %vm375 = vcmask 1042434
    %v376 = vsel %vm375, %v361, %v361
    %vm377 = vcmask 1043459
    %v378 = vsel %vm377, %v361, %v376
    %vm379 = vcmask 1044484
    %v380 = vsel %vm379, %v361, %v378
    %vm381 = vcmask 1045509
    %v382 = vsel %vm381, %v361, %v380
    %vm383 = vcmask 1046534
    %v384 = vsel %vm383, %v361, %v382
    %vm385 = vcmask 1047559
    %v386 = vsel %vm385, %v361, %v384
    %v387 = vsel %vm375, %v365, %v365
    %v388 = vsel %vm377, %v365, %v387
    %v389 = vsel %vm379, %v365, %v388
    %v390 = vsel %vm381, %v365, %v389
    %v391 = vsel %vm383, %v365, %v390
    %v392 = vsel %vm385, %v365, %v391
    %v393 = vsel %vm375, %v369, %v369
    %v394 = vsel %vm377, %v369, %v393
    %v395 = vsel %vm379, %v369, %v394
    %v396 = vsel %vm381, %v369, %v395
    %v397 = vsel %vm383, %v369, %v396
    %v398 = vsel %vm385, %v369, %v397
    %v399 = vsel %vm375, %v373, %v373
    %v400 = vsel %vm377, %v373, %v399
    %v401 = vsel %vm379, %v373, %v400
    %v402 = vsel %vm381, %v373, %v401
    %v403 = vsel %vm383, %v373, %v402
    %v404 = vsel %vm385, %v373, %v403
    %v409 = vadd.f32 %v50, %v386
    %v410 = vadd.f32 %v53, %v392
    %v411 = vadd.f32 %v56, %v398
    %v412 = vadd.f32 %v59, %v404
    %v413 = vmul.f32 %v130, 2.0
    %v414 = vmul.f32 %v203, 2.0
    %v415 = vmul.f32 %v276, 2.0
    %v416 = vmul.f32 %v349, 2.0
    %v417 = vsub.f32 %v409, %v413
    %v418 = vsub.f32 %v410, %v414
    %v419 = vsub.f32 %v411, %v415
    %v420 = vsub.f32 %v412, %v416
    %v421 = vmax.f32 %v417, 0.0
    %v422 = vmax.f32 %v418, 0.0
    %v423 = vmax.f32 %v419, 0.0
    %v424 = vmax.f32 %v420, 0.0
    %v425 = vrsqrt.pop %v421
    %v426 = vmul.f32 %v421, %v425
    %vm427 = vcmp.eq.f32.partialorder %v421, inf
    %v428 = vsel %vm427, %v421, %v426
    %vm429 = vcmp.eq.f32.partialorder %v421, 0.0
    %v430 = vand.u32 %v421, 2147483648
    %v431 = vsel %vm429, %v430, %v428
    %v432 = vrsqrt.pop %v422
    %v433 = vmul.f32 %v422, %v432
    %vm434 = vcmp.eq.f32.partialorder %v422, inf
    %v435 = vsel %vm434, %v422, %v433
    %vm436 = vcmp.eq.f32.partialorder %v422, 0.0
    %v437 = vand.u32 %v422, 2147483648
    %v438 = vsel %vm436, %v437, %v435
    %v439 = vrsqrt.pop %v423
    %v440 = vmul.f32 %v423, %v439
    %vm441 = vcmp.eq.f32.partialorder %v423, inf
    %v442 = vsel %vm441, %v423, %v440
    %vm443 = vcmp.eq.f32.partialorder %v423, 0.0
    %v444 = vand.u32 %v423, 2147483648
    %v445 = vsel %vm443, %v444, %v442
    %v446 = vrsqrt.pop %v424
    %v447 = vmul.f32 %v424, %v446
    %vm448 = vcmp.eq.f32.partialorder %v424, inf
    %v449 = vsel %vm448, %v424, %v447
    %vm450 = vcmp.eq.f32.partialorder %v424, 0.0
    %v451 = vand.u32 %v424, 2147483648
    %v452 = vsel %vm450, %v451, %v449
    %vm453 = vcmask 64512
    %v454 = vsel %vm453, %v431, 0.0
    %455 = vadd.xlane.f32.xlu0 %v454
    %v456 = vpop.xlane.xlu0 %455
    %v457 = vsel %vm453, %v438, 0.0
    %458 = vadd.xlane.f32.xlu0 %v457
    %v459 = vpop.xlane.xlu0 %458
    %v460 = vsel %vm453, %v445, 0.0
    %461 = vadd.xlane.f32.xlu0 %v460
    %v462 = vpop.xlane.xlu0 %461
    %v463 = vsel %vm453, %v452, 0.0
    %464 = vadd.xlane.f32.xlu0 %v463
    %v465 = vpop.xlane.xlu0 %464
    %v466 = vrcp.pop 8.0
    %v467 = vmul.f32 %v456, %v466
    %v468 = vmul.f32 %v459, %v466
    %v469 = vmul.f32 %v462, %v466
    %v470 = vmul.f32 %v465, %v466
    %v475 = vlaneseq
    %v476 = vshrl.u32 %v475, 7
    %v477 = vsub.s32 %v357, %v476
    %v478 = vrot.slane %v467, %v477
    %v479 = vlaneseq
    %v480 = vshrl.u32 %v479, 7
    %v481 = vsub.s32 %v357, %v480
    %v482 = vrot.slane %v468, %v481
    %v483 = vlaneseq
    %v484 = vshrl.u32 %v483, 7
    %v485 = vsub.s32 %v357, %v484
    %v486 = vrot.slane %v469, %v485
    %v487 = vlaneseq
    %v488 = vshrl.u32 %v487, 7
    %v489 = vsub.s32 %v357, %v488
    %v490 = vrot.slane %v470, %v489
    %v491 = vsel %vm374, %v482, %v478
    %v492 = vsel %vm375, %v486, %v491
    %v493 = vsel %vm377, %v490, %v492
    %vm495 = vcmask 60416
    %v496 = vsel %vm495, %v493, 0.0
    %497 = vadd.xlane.f32.xlu0 %v496
    %v498 = vpop.xlane.xlu0 %497
    %v499 = vmul.f32 %v498, %v466
    %v500 = vlaneseq
    %v501 = vshrl.u32 %v500, 7
    %v502 = vsub.s32 0, %v501
    %v503 = vrot.slane %v42, %v502
    %505 = vbcast.lane.b32.xlu0 %v503, 256
    %v506 = vpop.permute.xlu0 %505
    %v507 = vlaneseq
    %v508 = vshrl.u32 %v507, 7
    %v509 = vsub.s32 1, %v508
    %v510 = vrot.slane %v42, %v509
    %512 = vbcast.lane.b32.xlu0 %v510, 256
    %v513 = vpop.permute.xlu0 %512
    %v514 = vlaneseq
    %v515 = vshrl.u32 %v514, 7
    %v516 = vsub.s32 2, %v515
    %v517 = vrot.slane %v42, %v516
    %519 = vbcast.lane.b32.xlu0 %v517, 256
    %v520 = vpop.permute.xlu0 %519
    %v521 = vlaneseq
    %v522 = vshrl.u32 %v521, 7
    %v523 = vsub.s32 3, %v522
    %v524 = vrot.slane %v42, %v523
    %526 = vbcast.lane.b32.xlu0 %v524, 256
    %v527 = vpop.permute.xlu0 %526
    %v529 = vunpack.c.l.s4 1966171168
    %v530 = vunpack.c.0.s8 %v529
    %v531 = vlaneseq
    %v532 = vshrl.u32 %v531, 7
    %v533 = vsub.s32 %v530, %v532
    %v534 = vrot.slane %v42, %v533
    %v535 = vcombine.high %v534, %v534
    %v537 = vunpack.c.l.s4 1966171168
    %v538 = vunpack.c.0.s8 %v537
    %v539 = vlaneseq
    %v540 = vshrl.u32 %v539, 7
    %v541 = vsub.s32 %v538, %v540
    %v542 = vrot.slane %v534, %v541
    %v544 = vunpack.c.l.s4 1966171168
    %v545 = vunpack.c.0.s8 %v544
    %v546 = vlaneseq
    %v547 = vshrl.u32 %v546, 7
    %v548 = vsub.s32 %v545, %v547
    %v549 = vrot.slane %v535, %v548
    %v550 = vcombine.high %v542, %v542
    %v551 = vcombine.high %v549, %v549
    %v552 = vlaneseq
    %v553 = vshrl.u32 %v552, 7
    %v554 = vsub.s32 0, %v553
    %v555 = vrot.slane %v542, %v554
    %v556 = vlaneseq
    %v557 = vshrl.u32 %v556, 7
    %v558 = vsub.s32 0, %v557
    %v559 = vrot.slane %v549, %v558
    %v560 = vlaneseq
    %v561 = vshrl.u32 %v560, 7
    %v562 = vsub.s32 0, %v561
    %v563 = vrot.slane %v550, %v562
    %v564 = vlaneseq
    %v565 = vshrl.u32 %v564, 7
    %v566 = vsub.s32 0, %v565
    %v567 = vrot.slane %v551, %v566
    %vm568 = vcmp.eq.s32.totalorder %v506, %v555
    %vm569 = vcmp.eq.s32.totalorder %v513, %v559
    %vm570 = vcmp.eq.s32.totalorder %v520, %v563
    %vm571 = vcmp.eq.s32.totalorder %v527, %v567
    %v572 = vadd.f32 %v431, 0.2
    %v573 = vadd.f32 %v438, 0.2
    %v574 = vadd.f32 %v445, 0.2
    %v575 = vadd.f32 %v452, 0.2
    %v576 = vsel %vm568, %v572, -1e+30
    %v577 = vsel %vm569, %v573, -1e+30
    %v578 = vsel %vm570, %v574, -1e+30
    %v579 = vsel %vm571, %v575, -1e+30
    %v580 = vsel %vm568, 1e+30, %v431
    %v581 = vsel %vm569, 1e+30, %v438
    %v582 = vsel %vm570, 1e+30, %v445
    %v583 = vsel %vm571, 1e+30, %v452
    %v584 = vsel %vm453, %v576, -inf
    %585 = vmax.xlane.f32.xlu0 %v584
    %v586 = vpop.xlane.xlu0 %585
    %v587 = vsel %vm453, %v577, -inf
    %588 = vmax.xlane.f32.xlu0 %v587
    %v589 = vpop.xlane.xlu0 %588
    %v590 = vsel %vm453, %v578, -inf
    %591 = vmax.xlane.f32.xlu0 %v590
    %v592 = vpop.xlane.xlu0 %591
    %v593 = vsel %vm453, %v579, -inf
    %594 = vmax.xlane.f32.xlu0 %v593
    %v595 = vpop.xlane.xlu0 %594
    %v596 = vsel %vm453, %v580, inf
    %597 = vmin.xlane.f32.xlu0 %v596
    %v598 = vpop.xlane.xlu0 %597
    %v599 = vsel %vm453, %v581, inf
    %600 = vmin.xlane.f32.xlu0 %v599
    %v601 = vpop.xlane.xlu0 %600
    %v602 = vsel %vm453, %v582, inf
    %603 = vmin.xlane.f32.xlu0 %v602
    %v604 = vpop.xlane.xlu0 %603
    %v605 = vsel %vm453, %v583, inf
    %606 = vmin.xlane.f32.xlu0 %v605
    %v607 = vpop.xlane.xlu0 %606
    %v608 = vsub.f32 %v586, %v598
    %v609 = vsub.f32 %v589, %v601
    %v610 = vsub.f32 %v592, %v604
    %v611 = vsub.f32 %v595, %v607
    %v612 = vmax.f32 %v608, 0.0
    %v613 = vmax.f32 %v609, 0.0
    %v614 = vmax.f32 %v610, 0.0
    %v615 = vmax.f32 %v611, 0.0
    %v620 = vlaneseq
    %v621 = vshrl.u32 %v620, 7
    %v622 = vsub.s32 %v357, %v621
    %v623 = vrot.slane %v612, %v622
    %v624 = vlaneseq
    %v625 = vshrl.u32 %v624, 7
    %v626 = vsub.s32 %v357, %v625
    %v627 = vrot.slane %v613, %v626
    %v628 = vlaneseq
    %v629 = vshrl.u32 %v628, 7
    %v630 = vsub.s32 %v357, %v629
    %v631 = vrot.slane %v614, %v630
    %v632 = vlaneseq
    %v633 = vshrl.u32 %v632, 7
    %v634 = vsub.s32 %v357, %v633
    %v635 = vrot.slane %v615, %v634
    %v636 = vsel %vm374, %v627, %v623
    %v637 = vsel %vm375, %v631, %v636
    %v638 = vsel %vm377, %v635, %v637
    %v640 = vsel %vm495, %v638, 0.0
    %641 = vadd.xlane.f32.xlu0 %v640
    %v642 = vpop.xlane.xlu0 %641
    %v643 = vmul.f32 %v642, %v466
    %644 = vst.msk [vmem:[#allocation2] sm:$0xff] %vm453, %v576
    %645 = vst.msk [vmem:[#allocation2 + $0x8] sm:$0xff] %vm453, %v577
    %646 = vst.msk [vmem:[#allocation2 + $0x10] sm:$0xff] %vm453, %v578
    %647 = vst.msk [vmem:[#allocation2 + $0x18] sm:$0xff] %vm453, %v579
    %648 = vst.msk [vmem:[#allocation3] sm:$0xff] %vm453, %v580
    %649 = vst.msk [vmem:[#allocation3 + $0x8] sm:$0xff] %vm453, %v581
    %650 = vst.msk [vmem:[#allocation3 + $0x10] sm:$0xff] %vm453, %v582
    %651 = vst.msk [vmem:[#allocation3 + $0x18] sm:$0xff] %vm453, %v583
    %v652 = vld [vmem:[#allocation2] sm:$0xff]
    %v653 = vld [vmem:[#allocation2 + $0x8] sm:$0xff]
    %v654 = vld [vmem:[#allocation2 + $0x10] sm:$0xff]
    %v655 = vld [vmem:[#allocation2 + $0x18] sm:$0xff]
    %v656 = vld [vmem:[#allocation3] sm:$0xff]
    %v657 = vld [vmem:[#allocation3 + $0x8] sm:$0xff]
    %v658 = vld [vmem:[#allocation3 + $0x10] sm:$0xff]
    %v659 = vld [vmem:[#allocation3 + $0x18] sm:$0xff]
    %v660 = vlaneseq
    %v661 = vshrl.u32 %v660, 7
    %v662 = vsub.s32 0, %v661
    %v663 = vrot.slane %v652, %v662
    %665 = vbcast.lane.b32.xlu0 %v663, 256
    %v666 = vpop.permute.xlu0 %665
    %v667 = vlaneseq
    %v668 = vshrl.u32 %v667, 7
    %v669 = vsub.s32 1, %v668
    %v670 = vrot.slane %v652, %v669
    %672 = vbcast.lane.b32.xlu0 %v670, 256
    %v673 = vpop.permute.xlu0 %672
    %v674 = vlaneseq
    %v675 = vshrl.u32 %v674, 7
    %v676 = vsub.s32 2, %v675
    %v677 = vrot.slane %v652, %v676
    %679 = vbcast.lane.b32.xlu0 %v677, 256
    %v680 = vpop.permute.xlu0 %679
    %v681 = vlaneseq
    %v682 = vshrl.u32 %v681, 7
    %v683 = vsub.s32 3, %v682
    %v684 = vrot.slane %v652, %v683
    %686 = vbcast.lane.b32.xlu0 %v684, 256
    %v687 = vpop.permute.xlu0 %686
    %v688 = vlaneseq
    %v689 = vshrl.u32 %v688, 7
    %v690 = vsub.s32 4, %v689
    %v691 = vrot.slane %v652, %v690
    %693 = vbcast.lane.b32.xlu0 %v691, 256
    %v694 = vpop.permute.xlu0 %693
    %v695 = vlaneseq
    %v696 = vshrl.u32 %v695, 7
    %v697 = vsub.s32 5, %v696
    %v698 = vrot.slane %v652, %v697
    %700 = vbcast.lane.b32.xlu0 %v698, 256
    %v701 = vpop.permute.xlu0 %700
    %v702 = vlaneseq
    %v703 = vshrl.u32 %v702, 7
    %v704 = vsub.s32 6, %v703
    %v705 = vrot.slane %v652, %v704
    %707 = vbcast.lane.b32.xlu0 %v705, 256
    %v708 = vpop.permute.xlu0 %707
    %v709 = vlaneseq
    %v710 = vshrl.u32 %v709, 7
    %v711 = vsub.s32 7, %v710
    %v712 = vrot.slane %v652, %v711
    %714 = vbcast.lane.b32.xlu0 %v712, 256
    %v715 = vpop.permute.xlu0 %714
    %v716 = vlaneseq
    %v717 = vshrl.u32 %v716, 7
    %v718 = vsub.s32 0, %v717
    %v719 = vrot.slane %v653, %v718
    %721 = vbcast.lane.b32.xlu0 %v719, 256
    %v722 = vpop.permute.xlu0 %721
    %v723 = vlaneseq
    %v724 = vshrl.u32 %v723, 7
    %v725 = vsub.s32 1, %v724
    %v726 = vrot.slane %v653, %v725
    %728 = vbcast.lane.b32.xlu0 %v726, 256
    %v729 = vpop.permute.xlu0 %728
    %v730 = vlaneseq
    %v731 = vshrl.u32 %v730, 7
    %v732 = vsub.s32 2, %v731
    %v733 = vrot.slane %v653, %v732
    %735 = vbcast.lane.b32.xlu0 %v733, 256
    %v736 = vpop.permute.xlu0 %735
    %v737 = vlaneseq
    %v738 = vshrl.u32 %v737, 7
    %v739 = vsub.s32 3, %v738
    %v740 = vrot.slane %v653, %v739
    %742 = vbcast.lane.b32.xlu0 %v740, 256
    %v743 = vpop.permute.xlu0 %742
    %v744 = vlaneseq
    %v745 = vshrl.u32 %v744, 7
    %v746 = vsub.s32 4, %v745
    %v747 = vrot.slane %v653, %v746
    %749 = vbcast.lane.b32.xlu0 %v747, 256
    %v750 = vpop.permute.xlu0 %749
    %v751 = vlaneseq
    %v752 = vshrl.u32 %v751, 7
    %v753 = vsub.s32 5, %v752
    %v754 = vrot.slane %v653, %v753
    %756 = vbcast.lane.b32.xlu0 %v754, 256
    %v757 = vpop.permute.xlu0 %756
    %v758 = vlaneseq
    %v759 = vshrl.u32 %v758, 7
    %v760 = vsub.s32 6, %v759
    %v761 = vrot.slane %v653, %v760
    %763 = vbcast.lane.b32.xlu0 %v761, 256
    %v764 = vpop.permute.xlu0 %763
    %v765 = vlaneseq
    %v766 = vshrl.u32 %v765, 7
    %v767 = vsub.s32 7, %v766
    %v768 = vrot.slane %v653, %v767
    %770 = vbcast.lane.b32.xlu0 %v768, 256
    %v771 = vpop.permute.xlu0 %770
    %v772 = vlaneseq
    %v773 = vshrl.u32 %v772, 7
    %v774 = vsub.s32 0, %v773
    %v775 = vrot.slane %v654, %v774
    %777 = vbcast.lane.b32.xlu0 %v775, 256
    %v778 = vpop.permute.xlu0 %777
    %v779 = vlaneseq
    %v780 = vshrl.u32 %v779, 7
    %v781 = vsub.s32 1, %v780
    %v782 = vrot.slane %v654, %v781
    %784 = vbcast.lane.b32.xlu0 %v782, 256
    %v785 = vpop.permute.xlu0 %784
    %v786 = vlaneseq
    %v787 = vshrl.u32 %v786, 7
    %v788 = vsub.s32 2, %v787
    %v789 = vrot.slane %v654, %v788
    %791 = vbcast.lane.b32.xlu0 %v789, 256
    %v792 = vpop.permute.xlu0 %791
    %v793 = vlaneseq
    %v794 = vshrl.u32 %v793, 7
    %v795 = vsub.s32 3, %v794
    %v796 = vrot.slane %v654, %v795
    %798 = vbcast.lane.b32.xlu0 %v796, 256
    %v799 = vpop.permute.xlu0 %798
    %v800 = vlaneseq
    %v801 = vshrl.u32 %v800, 7
    %v802 = vsub.s32 4, %v801
    %v803 = vrot.slane %v654, %v802
    %805 = vbcast.lane.b32.xlu0 %v803, 256
    %v806 = vpop.permute.xlu0 %805
    %v807 = vlaneseq
    %v808 = vshrl.u32 %v807, 7
    %v809 = vsub.s32 5, %v808
    %v810 = vrot.slane %v654, %v809
    %812 = vbcast.lane.b32.xlu0 %v810, 256
    %v813 = vpop.permute.xlu0 %812
    %v814 = vlaneseq
    %v815 = vshrl.u32 %v814, 7
    %v816 = vsub.s32 6, %v815
    %v817 = vrot.slane %v654, %v816
    %819 = vbcast.lane.b32.xlu0 %v817, 256
    %v820 = vpop.permute.xlu0 %819
    %v821 = vlaneseq
    %v822 = vshrl.u32 %v821, 7
    %v823 = vsub.s32 7, %v822
    %v824 = vrot.slane %v654, %v823
    %826 = vbcast.lane.b32.xlu0 %v824, 256
    %v827 = vpop.permute.xlu0 %826
    %v828 = vlaneseq
    %v829 = vshrl.u32 %v828, 7
    %v830 = vsub.s32 0, %v829
    %v831 = vrot.slane %v655, %v830
    %833 = vbcast.lane.b32.xlu0 %v831, 256
    %v834 = vpop.permute.xlu0 %833
    %v835 = vlaneseq
    %v836 = vshrl.u32 %v835, 7
    %v837 = vsub.s32 1, %v836
    %v838 = vrot.slane %v655, %v837
    %840 = vbcast.lane.b32.xlu0 %v838, 256
    %v841 = vpop.permute.xlu0 %840
    %v842 = vlaneseq
    %v843 = vshrl.u32 %v842, 7
    %v844 = vsub.s32 2, %v843
    %v845 = vrot.slane %v655, %v844
    %847 = vbcast.lane.b32.xlu0 %v845, 256
    %v848 = vpop.permute.xlu0 %847
    %v849 = vlaneseq
    %v850 = vshrl.u32 %v849, 7
    %v851 = vsub.s32 3, %v850
    %v852 = vrot.slane %v655, %v851
    %854 = vbcast.lane.b32.xlu0 %v852, 256
    %v855 = vpop.permute.xlu0 %854
    %v856 = vlaneseq
    %v857 = vshrl.u32 %v856, 7
    %v858 = vsub.s32 4, %v857
    %v859 = vrot.slane %v655, %v858
    %861 = vbcast.lane.b32.xlu0 %v859, 256
    %v862 = vpop.permute.xlu0 %861
    %v863 = vlaneseq
    %v864 = vshrl.u32 %v863, 7
    %v865 = vsub.s32 5, %v864
    %v866 = vrot.slane %v655, %v865
    %868 = vbcast.lane.b32.xlu0 %v866, 256
    %v869 = vpop.permute.xlu0 %868
    %v870 = vlaneseq
    %v871 = vshrl.u32 %v870, 7
    %v872 = vsub.s32 6, %v871
    %v873 = vrot.slane %v655, %v872
    %875 = vbcast.lane.b32.xlu0 %v873, 256
    %v876 = vpop.permute.xlu0 %875
    %v877 = vlaneseq
    %v878 = vshrl.u32 %v877, 7
    %v879 = vsub.s32 7, %v878
    %v880 = vrot.slane %v655, %v879
    %882 = vbcast.lane.b32.xlu0 %v880, 256
    %v883 = vpop.permute.xlu0 %882
    %v888 = vcombine.high %v656, %v656
    %v890 = vunpack.c.l.s4 1966171168
    %v891 = vunpack.c.0.s8 %v890
    %v892 = vlaneseq
    %v893 = vshrl.u32 %v892, 7
    %v894 = vsub.s32 %v891, %v893
    %v895 = vrot.slane %v656, %v894
    %v897 = vunpack.c.l.s4 1966171168
    %v898 = vunpack.c.0.s8 %v897
    %v899 = vlaneseq
    %v900 = vshrl.u32 %v899, 7
    %v901 = vsub.s32 %v898, %v900
    %v902 = vrot.slane %v888, %v901
    %v903 = vcombine.high %v895, %v895
    %v904 = vcombine.high %v902, %v902
    %v906 = vunpack.c.l.s4 1966171168
    %v907 = vunpack.c.0.s8 %v906
    %v908 = vlaneseq
    %v909 = vshrl.u32 %v908, 7
    %v910 = vsub.s32 %v907, %v909
    %v911 = vrot.slane %v895, %v910
    %v913 = vunpack.c.l.s4 1966171168
    %v914 = vunpack.c.0.s8 %v913
    %v915 = vlaneseq
    %v916 = vshrl.u32 %v915, 7
    %v917 = vsub.s32 %v914, %v916
    %v918 = vrot.slane %v902, %v917
    %v920 = vunpack.c.l.s4 1966171168
    %v921 = vunpack.c.0.s8 %v920
    %v922 = vlaneseq
    %v923 = vshrl.u32 %v922, 7
    %v924 = vsub.s32 %v921, %v923
    %v925 = vrot.slane %v903, %v924
    %v927 = vunpack.c.l.s4 1966171168
    %v928 = vunpack.c.0.s8 %v927
    %v929 = vlaneseq
    %v930 = vshrl.u32 %v929, 7
    %v931 = vsub.s32 %v928, %v930
    %v932 = vrot.slane %v904, %v931
    %v933 = vcombine.high %v911, %v911
    %v934 = vcombine.high %v918, %v918
    %v935 = vcombine.high %v925, %v925
    %v936 = vcombine.high %v932, %v932
    %v937 = vcombine.high %v657, %v657
    %v939 = vunpack.c.l.s4 1966171168
    %v940 = vunpack.c.0.s8 %v939
    %v941 = vlaneseq
    %v942 = vshrl.u32 %v941, 7
    %v943 = vsub.s32 %v940, %v942
    %v944 = vrot.slane %v657, %v943
    %v946 = vunpack.c.l.s4 1966171168
    %v947 = vunpack.c.0.s8 %v946
    %v948 = vlaneseq
    %v949 = vshrl.u32 %v948, 7
    %v950 = vsub.s32 %v947, %v949
    %v951 = vrot.slane %v937, %v950
    %v952 = vcombine.high %v944, %v944
    %v953 = vcombine.high %v951, %v951
    %v955 = vunpack.c.l.s4 1966171168
    %v956 = vunpack.c.0.s8 %v955
    %v957 = vlaneseq
    %v958 = vshrl.u32 %v957, 7
    %v959 = vsub.s32 %v956, %v958
    %v960 = vrot.slane %v944, %v959
    %v962 = vunpack.c.l.s4 1966171168
    %v963 = vunpack.c.0.s8 %v962
    %v964 = vlaneseq
    %v965 = vshrl.u32 %v964, 7
    %v966 = vsub.s32 %v963, %v965
    %v967 = vrot.slane %v951, %v966
    %v969 = vunpack.c.l.s4 1966171168
    %v970 = vunpack.c.0.s8 %v969
    %v971 = vlaneseq
    %v972 = vshrl.u32 %v971, 7
    %v973 = vsub.s32 %v970, %v972
    %v974 = vrot.slane %v952, %v973
    %v976 = vunpack.c.l.s4 1966171168
    %v977 = vunpack.c.0.s8 %v976
    %v978 = vlaneseq
    %v979 = vshrl.u32 %v978, 7
    %v980 = vsub.s32 %v977, %v979
    %v981 = vrot.slane %v953, %v980
    %v982 = vcombine.high %v960, %v960
    %v983 = vcombine.high %v967, %v967
    %v984 = vcombine.high %v974, %v974
    %v985 = vcombine.high %v981, %v981
    %v986 = vcombine.high %v658, %v658
    %v988 = vunpack.c.l.s4 1966171168
    %v989 = vunpack.c.0.s8 %v988
    %v990 = vlaneseq
    %v991 = vshrl.u32 %v990, 7
    %v992 = vsub.s32 %v989, %v991
    %v993 = vrot.slane %v658, %v992
    %v995 = vunpack.c.l.s4 1966171168
    %v996 = vunpack.c.0.s8 %v995
    %v997 = vlaneseq
    %v998 = vshrl.u32 %v997, 7
    %v999 = vsub.s32 %v996, %v998
    %v1000 = vrot.slane %v986, %v999
    %v1001 = vcombine.high %v993, %v993
    %v1002 = vcombine.high %v1000, %v1000
    %v1004 = vunpack.c.l.s4 1966171168
    %v1005 = vunpack.c.0.s8 %v1004
    %v1006 = vlaneseq
    %v1007 = vshrl.u32 %v1006, 7
    %v1008 = vsub.s32 %v1005, %v1007
    %v1009 = vrot.slane %v993, %v1008
    %v1011 = vunpack.c.l.s4 1966171168
    %v1012 = vunpack.c.0.s8 %v1011
    %v1013 = vlaneseq
    %v1014 = vshrl.u32 %v1013, 7
    %v1015 = vsub.s32 %v1012, %v1014
    %v1016 = vrot.slane %v1000, %v1015
    %v1018 = vunpack.c.l.s4 1966171168
    %v1019 = vunpack.c.0.s8 %v1018
    %v1020 = vlaneseq
    %v1021 = vshrl.u32 %v1020, 7
    %v1022 = vsub.s32 %v1019, %v1021
    %v1023 = vrot.slane %v1001, %v1022
    %v1025 = vunpack.c.l.s4 1966171168
    %v1026 = vunpack.c.0.s8 %v1025
    %v1027 = vlaneseq
    %v1028 = vshrl.u32 %v1027, 7
    %v1029 = vsub.s32 %v1026, %v1028
    %v1030 = vrot.slane %v1002, %v1029
    %v1031 = vcombine.high %v1009, %v1009
    %v1032 = vcombine.high %v1016, %v1016
    %v1033 = vcombine.high %v1023, %v1023
    %v1034 = vcombine.high %v1030, %v1030
    %v1035 = vcombine.high %v659, %v659
    %v1037 = vunpack.c.l.s4 1966171168
    %v1038 = vunpack.c.0.s8 %v1037
    %v1039 = vlaneseq
    %v1040 = vshrl.u32 %v1039, 7
    %v1041 = vsub.s32 %v1038, %v1040
    %v1042 = vrot.slane %v659, %v1041
    %v1044 = vunpack.c.l.s4 1966171168
    %v1045 = vunpack.c.0.s8 %v1044
    %v1046 = vlaneseq
    %v1047 = vshrl.u32 %v1046, 7
    %v1048 = vsub.s32 %v1045, %v1047
    %v1049 = vrot.slane %v1035, %v1048
    %v1050 = vcombine.high %v1042, %v1042
    %v1051 = vcombine.high %v1049, %v1049
    %v1053 = vunpack.c.l.s4 1966171168
    %v1054 = vunpack.c.0.s8 %v1053
    %v1055 = vlaneseq
    %v1056 = vshrl.u32 %v1055, 7
    %v1057 = vsub.s32 %v1054, %v1056
    %v1058 = vrot.slane %v1042, %v1057
    %v1060 = vunpack.c.l.s4 1966171168
    %v1061 = vunpack.c.0.s8 %v1060
    %v1062 = vlaneseq
    %v1063 = vshrl.u32 %v1062, 7
    %v1064 = vsub.s32 %v1061, %v1063
    %v1065 = vrot.slane %v1049, %v1064
    %v1067 = vunpack.c.l.s4 1966171168
    %v1068 = vunpack.c.0.s8 %v1067
    %v1069 = vlaneseq
    %v1070 = vshrl.u32 %v1069, 7
    %v1071 = vsub.s32 %v1068, %v1070
    %v1072 = vrot.slane %v1050, %v1071
    %v1074 = vunpack.c.l.s4 1966171168
    %v1075 = vunpack.c.0.s8 %v1074
    %v1076 = vlaneseq
    %v1077 = vshrl.u32 %v1076, 7
    %v1078 = vsub.s32 %v1075, %v1077
    %v1079 = vrot.slane %v1051, %v1078
    %v1080 = vcombine.high %v1058, %v1058
    %v1081 = vcombine.high %v1065, %v1065
    %v1082 = vcombine.high %v1072, %v1072
    %v1083 = vcombine.high %v1079, %v1079
    %v1084 = vlaneseq
    %v1085 = vshrl.u32 %v1084, 7
    %v1086 = vsub.s32 0, %v1085
    %v1087 = vrot.slane %v911, %v1086
    %v1088 = vlaneseq
    %v1089 = vshrl.u32 %v1088, 7
    %v1090 = vsub.s32 0, %v1089
    %v1091 = vrot.slane %v925, %v1090
    %v1092 = vlaneseq
    %v1093 = vshrl.u32 %v1092, 7
    %v1094 = vsub.s32 0, %v1093
    %v1095 = vrot.slane %v933, %v1094
    %v1096 = vlaneseq
    %v1097 = vshrl.u32 %v1096, 7
    %v1098 = vsub.s32 0, %v1097
    %v1099 = vrot.slane %v935, %v1098
    %v1100 = vlaneseq
    %v1101 = vshrl.u32 %v1100, 7
    %v1102 = vsub.s32 0, %v1101
    %v1103 = vrot.slane %v918, %v1102
    %v1104 = vlaneseq
    %v1105 = vshrl.u32 %v1104, 7
    %v1106 = vsub.s32 0, %v1105
    %v1107 = vrot.slane %v932, %v1106
    %v1108 = vlaneseq
    %v1109 = vshrl.u32 %v1108, 7
    %v1110 = vsub.s32 0, %v1109
    %v1111 = vrot.slane %v934, %v1110
    %v1112 = vlaneseq
    %v1113 = vshrl.u32 %v1112, 7
    %v1114 = vsub.s32 0, %v1113
    %v1115 = vrot.slane %v936, %v1114
    %v1116 = vlaneseq
    %v1117 = vshrl.u32 %v1116, 7
    %v1118 = vsub.s32 0, %v1117
    %v1119 = vrot.slane %v960, %v1118
    %v1120 = vlaneseq
    %v1121 = vshrl.u32 %v1120, 7
    %v1122 = vsub.s32 0, %v1121
    %v1123 = vrot.slane %v974, %v1122
    %v1124 = vlaneseq
    %v1125 = vshrl.u32 %v1124, 7
    %v1126 = vsub.s32 0, %v1125
    %v1127 = vrot.slane %v982, %v1126
    %v1128 = vlaneseq
    %v1129 = vshrl.u32 %v1128, 7
    %v1130 = vsub.s32 0, %v1129
    %v1131 = vrot.slane %v984, %v1130
    %v1132 = vlaneseq
    %v1133 = vshrl.u32 %v1132, 7
    %v1134 = vsub.s32 0, %v1133
    %v1135 = vrot.slane %v967, %v1134
    %v1136 = vlaneseq
    %v1137 = vshrl.u32 %v1136, 7
    %v1138 = vsub.s32 0, %v1137
    %v1139 = vrot.slane %v981, %v1138
    %v1140 = vlaneseq
    %v1141 = vshrl.u32 %v1140, 7
    %v1142 = vsub.s32 0, %v1141
    %v1143 = vrot.slane %v983, %v1142
    %v1144 = vlaneseq
    %v1145 = vshrl.u32 %v1144, 7
    %v1146 = vsub.s32 0, %v1145
    %v1147 = vrot.slane %v985, %v1146
    %v1148 = vlaneseq
    %v1149 = vshrl.u32 %v1148, 7
    %v1150 = vsub.s32 0, %v1149
    %v1151 = vrot.slane %v1009, %v1150
    %v1152 = vlaneseq
    %v1153 = vshrl.u32 %v1152, 7
    %v1154 = vsub.s32 0, %v1153
    %v1155 = vrot.slane %v1023, %v1154
    %v1156 = vlaneseq
    %v1157 = vshrl.u32 %v1156, 7
    %v1158 = vsub.s32 0, %v1157
    %v1159 = vrot.slane %v1031, %v1158
    %v1160 = vlaneseq
    %v1161 = vshrl.u32 %v1160, 7
    %v1162 = vsub.s32 0, %v1161
    %v1163 = vrot.slane %v1033, %v1162
    %v1164 = vlaneseq
    %v1165 = vshrl.u32 %v1164, 7
    %v1166 = vsub.s32 0, %v1165
    %v1167 = vrot.slane %v1016, %v1166
    %v1168 = vlaneseq
    %v1169 = vshrl.u32 %v1168, 7
    %v1170 = vsub.s32 0, %v1169
    %v1171 = vrot.slane %v1030, %v1170
    %v1172 = vlaneseq
    %v1173 = vshrl.u32 %v1172, 7
    %v1174 = vsub.s32 0, %v1173
    %v1175 = vrot.slane %v1032, %v1174
    %v1176 = vlaneseq
    %v1177 = vshrl.u32 %v1176, 7
    %v1178 = vsub.s32 0, %v1177
    %v1179 = vrot.slane %v1034, %v1178
    %v1180 = vlaneseq
    %v1181 = vshrl.u32 %v1180, 7
    %v1182 = vsub.s32 0, %v1181
    %v1183 = vrot.slane %v1058, %v1182
    %v1184 = vlaneseq
    %v1185 = vshrl.u32 %v1184, 7
    %v1186 = vsub.s32 0, %v1185
    %v1187 = vrot.slane %v1072, %v1186
    %v1188 = vlaneseq
    %v1189 = vshrl.u32 %v1188, 7
    %v1190 = vsub.s32 0, %v1189
    %v1191 = vrot.slane %v1080, %v1190
    %v1192 = vlaneseq
    %v1193 = vshrl.u32 %v1192, 7
    %v1194 = vsub.s32 0, %v1193
    %v1195 = vrot.slane %v1082, %v1194
    %v1196 = vlaneseq
    %v1197 = vshrl.u32 %v1196, 7
    %v1198 = vsub.s32 0, %v1197
    %v1199 = vrot.slane %v1065, %v1198
    %v1200 = vlaneseq
    %v1201 = vshrl.u32 %v1200, 7
    %v1202 = vsub.s32 0, %v1201
    %v1203 = vrot.slane %v1079, %v1202
    %v1204 = vlaneseq
    %v1205 = vshrl.u32 %v1204, 7
    %v1206 = vsub.s32 0, %v1205
    %v1207 = vrot.slane %v1081, %v1206
    %v1208 = vlaneseq
    %v1209 = vshrl.u32 %v1208, 7
    %v1210 = vsub.s32 0, %v1209
    %v1211 = vrot.slane %v1083, %v1210
    %v1244 = vsub.f32 %v666, %v1087
    %v1245 = vsub.f32 %v673, %v1091
    %v1246 = vsub.f32 %v680, %v1095
    %v1247 = vsub.f32 %v687, %v1099
    %v1248 = vsub.f32 %v694, %v1103
    %v1249 = vsub.f32 %v701, %v1107
    %v1250 = vsub.f32 %v708, %v1111
    %v1251 = vsub.f32 %v715, %v1115
    %v1252 = vsub.f32 %v722, %v1119
    %v1253 = vsub.f32 %v729, %v1123
    %v1254 = vsub.f32 %v736, %v1127
    %v1255 = vsub.f32 %v743, %v1131
    %v1256 = vsub.f32 %v750, %v1135
    %v1257 = vsub.f32 %v757, %v1139
    %v1258 = vsub.f32 %v764, %v1143
    %v1259 = vsub.f32 %v771, %v1147
    %v1260 = vsub.f32 %v778, %v1151
    %v1261 = vsub.f32 %v785, %v1155
    %v1262 = vsub.f32 %v792, %v1159
    %v1263 = vsub.f32 %v799, %v1163
    %v1264 = vsub.f32 %v806, %v1167
    %v1265 = vsub.f32 %v813, %v1171
    %v1266 = vsub.f32 %v820, %v1175
    %v1267 = vsub.f32 %v827, %v1179
    %v1268 = vsub.f32 %v834, %v1183
    %v1269 = vsub.f32 %v841, %v1187
    %v1270 = vsub.f32 %v848, %v1191
    %v1271 = vsub.f32 %v855, %v1195
    %v1272 = vsub.f32 %v862, %v1199
    %v1273 = vsub.f32 %v869, %v1203
    %v1274 = vsub.f32 %v876, %v1207
    %v1275 = vsub.f32 %v883, %v1211
    %vm1276 = vcmp.gt.f32.partialorder %v1244, 0.0
    %vm1277 = vcmp.gt.f32.partialorder %v1245, 0.0
    %vm1278 = vcmp.gt.f32.partialorder %v1246, 0.0
    %vm1279 = vcmp.gt.f32.partialorder %v1247, 0.0
    %vm1280 = vcmp.gt.f32.partialorder %v1248, 0.0
    %vm1281 = vcmp.gt.f32.partialorder %v1249, 0.0
    %vm1282 = vcmp.gt.f32.partialorder %v1250, 0.0
    %vm1283 = vcmp.gt.f32.partialorder %v1251, 0.0
    %vm1284 = vcmp.gt.f32.partialorder %v1252, 0.0
    %vm1285 = vcmp.gt.f32.partialorder %v1253, 0.0
    %vm1286 = vcmp.gt.f32.partialorder %v1254, 0.0
    %vm1287 = vcmp.gt.f32.partialorder %v1255, 0.0
    %vm1288 = vcmp.gt.f32.partialorder %v1256, 0.0
    %vm1289 = vcmp.gt.f32.partialorder %v1257, 0.0
    %vm1290 = vcmp.gt.f32.partialorder %v1258, 0.0
    %vm1291 = vcmp.gt.f32.partialorder %v1259, 0.0
    %vm1292 = vcmp.gt.f32.partialorder %v1260, 0.0
    %vm1293 = vcmp.gt.f32.partialorder %v1261, 0.0
    %vm1294 = vcmp.gt.f32.partialorder %v1262, 0.0
    %vm1295 = vcmp.gt.f32.partialorder %v1263, 0.0
    %vm1296 = vcmp.gt.f32.partialorder %v1264, 0.0
    %vm1297 = vcmp.gt.f32.partialorder %v1265, 0.0
    %vm1298 = vcmp.gt.f32.partialorder %v1266, 0.0
    %vm1299 = vcmp.gt.f32.partialorder %v1267, 0.0
    %vm1300 = vcmp.gt.f32.partialorder %v1268, 0.0
    %vm1301 = vcmp.gt.f32.partialorder %v1269, 0.0
    %vm1302 = vcmp.gt.f32.partialorder %v1270, 0.0
    %vm1303 = vcmp.gt.f32.partialorder %v1271, 0.0
    %vm1304 = vcmp.gt.f32.partialorder %v1272, 0.0
    %vm1305 = vcmp.gt.f32.partialorder %v1273, 0.0
    %vm1306 = vcmp.gt.f32.partialorder %v1274, 0.0
    %vm1307 = vcmp.gt.f32.partialorder %v1275, 0.0
    %v1308 = vsel %vm1276, %v1244, 0.0
    %v1309 = vsel %vm1277, %v1245, 0.0
    %v1310 = vsel %vm1278, %v1246, 0.0
    %v1311 = vsel %vm1279, %v1247, 0.0
    %v1312 = vsel %vm1280, %v1248, 0.0
    %v1313 = vsel %vm1281, %v1249, 0.0
    %v1314 = vsel %vm1282, %v1250, 0.0
    %v1315 = vsel %vm1283, %v1251, 0.0
    %v1316 = vsel %vm1284, %v1252, 0.0
    %v1317 = vsel %vm1285, %v1253, 0.0
    %v1318 = vsel %vm1286, %v1254, 0.0
    %v1319 = vsel %vm1287, %v1255, 0.0
    %v1320 = vsel %vm1288, %v1256, 0.0
    %v1321 = vsel %vm1289, %v1257, 0.0
    %v1322 = vsel %vm1290, %v1258, 0.0
    %v1323 = vsel %vm1291, %v1259, 0.0
    %v1324 = vsel %vm1292, %v1260, 0.0
    %v1325 = vsel %vm1293, %v1261, 0.0
    %v1326 = vsel %vm1294, %v1262, 0.0
    %v1327 = vsel %vm1295, %v1263, 0.0
    %v1328 = vsel %vm1296, %v1264, 0.0
    %v1329 = vsel %vm1297, %v1265, 0.0
    %v1330 = vsel %vm1298, %v1266, 0.0
    %v1331 = vsel %vm1299, %v1267, 0.0
    %v1332 = vsel %vm1300, %v1268, 0.0
    %v1333 = vsel %vm1301, %v1269, 0.0
    %v1334 = vsel %vm1302, %v1270, 0.0
    %v1335 = vsel %vm1303, %v1271, 0.0
    %v1336 = vsel %vm1304, %v1272, 0.0
    %v1337 = vsel %vm1305, %v1273, 0.0
    %v1338 = vsel %vm1306, %v1274, 0.0
    %v1339 = vsel %vm1307, %v1275, 0.0
    %v1340 = vsel %vm453, %v1308, 0.0
    %1341 = vadd.xlane.f32.xlu0 %v1340
    %v1342 = vpop.xlane.xlu0 %1341
    %v1343 = vsel %vm453, %v1309, 0.0
    %1344 = vadd.xlane.f32.xlu0 %v1343
    %v1345 = vpop.xlane.xlu0 %1344
    %v1346 = vsel %vm453, %v1310, 0.0
    %1347 = vadd.xlane.f32.xlu0 %v1346
    %v1348 = vpop.xlane.xlu0 %1347
    %v1349 = vsel %vm453, %v1311, 0.0
    %1350 = vadd.xlane.f32.xlu0 %v1349
    %v1351 = vpop.xlane.xlu0 %1350
    %v1352 = vsel %vm453, %v1312, 0.0
    %1353 = vadd.xlane.f32.xlu0 %v1352
    %v1354 = vpop.xlane.xlu0 %1353
    %v1355 = vsel %vm453, %v1313, 0.0
    %1356 = vadd.xlane.f32.xlu0 %v1355
    %v1357 = vpop.xlane.xlu0 %1356
    %v1358 = vsel %vm453, %v1314, 0.0
    %1359 = vadd.xlane.f32.xlu0 %v1358
    %v1360 = vpop.xlane.xlu0 %1359
    %v1361 = vsel %vm453, %v1315, 0.0
    %1362 = vadd.xlane.f32.xlu0 %v1361
    %v1363 = vpop.xlane.xlu0 %1362
    %v1364 = vsel %vm453, %v1316, 0.0
    %1365 = vadd.xlane.f32.xlu0 %v1364
    %v1366 = vpop.xlane.xlu0 %1365
    %v1367 = vsel %vm453, %v1317, 0.0
    %1368 = vadd.xlane.f32.xlu0 %v1367
    %v1369 = vpop.xlane.xlu0 %1368
    %v1370 = vsel %vm453, %v1318, 0.0
    %1371 = vadd.xlane.f32.xlu0 %v1370
    %v1372 = vpop.xlane.xlu0 %1371
    %v1373 = vsel %vm453, %v1319, 0.0
    %1374 = vadd.xlane.f32.xlu0 %v1373
    %v1375 = vpop.xlane.xlu0 %1374
    %v1376 = vsel %vm453, %v1320, 0.0
    %1377 = vadd.xlane.f32.xlu0 %v1376
    %v1378 = vpop.xlane.xlu0 %1377
    %v1379 = vsel %vm453, %v1321, 0.0
    %1380 = vadd.xlane.f32.xlu0 %v1379
    %v1381 = vpop.xlane.xlu0 %1380
    %v1382 = vsel %vm453, %v1322, 0.0
    %1383 = vadd.xlane.f32.xlu0 %v1382
    %v1384 = vpop.xlane.xlu0 %1383
    %v1385 = vsel %vm453, %v1323, 0.0
    %1386 = vadd.xlane.f32.xlu0 %v1385
    %v1387 = vpop.xlane.xlu0 %1386
    %v1388 = vsel %vm453, %v1324, 0.0
    %1389 = vadd.xlane.f32.xlu0 %v1388
    %v1390 = vpop.xlane.xlu0 %1389
    %v1391 = vsel %vm453, %v1325, 0.0
    %1392 = vadd.xlane.f32.xlu0 %v1391
    %v1393 = vpop.xlane.xlu0 %1392
    %v1394 = vsel %vm453, %v1326, 0.0
    %1395 = vadd.xlane.f32.xlu0 %v1394
    %v1396 = vpop.xlane.xlu0 %1395
    %v1397 = vsel %vm453, %v1327, 0.0
    %1398 = vadd.xlane.f32.xlu0 %v1397
    %v1399 = vpop.xlane.xlu0 %1398
    %v1400 = vsel %vm453, %v1328, 0.0
    %1401 = vadd.xlane.f32.xlu0 %v1400
    %v1402 = vpop.xlane.xlu0 %1401
    %v1403 = vsel %vm453, %v1329, 0.0
    %1404 = vadd.xlane.f32.xlu0 %v1403
    %v1405 = vpop.xlane.xlu0 %1404
    %v1406 = vsel %vm453, %v1330, 0.0
    %1407 = vadd.xlane.f32.xlu0 %v1406
    %v1408 = vpop.xlane.xlu0 %1407
    %v1409 = vsel %vm453, %v1331, 0.0
    %1410 = vadd.xlane.f32.xlu0 %v1409
    %v1411 = vpop.xlane.xlu0 %1410
    %v1412 = vsel %vm453, %v1332, 0.0
    %1413 = vadd.xlane.f32.xlu0 %v1412
    %v1414 = vpop.xlane.xlu0 %1413
    %v1415 = vsel %vm453, %v1333, 0.0
    %1416 = vadd.xlane.f32.xlu0 %v1415
    %v1417 = vpop.xlane.xlu0 %1416
    %v1418 = vsel %vm453, %v1334, 0.0
    %1419 = vadd.xlane.f32.xlu0 %v1418
    %v1420 = vpop.xlane.xlu0 %1419
    %v1421 = vsel %vm453, %v1335, 0.0
    %1422 = vadd.xlane.f32.xlu0 %v1421
    %v1423 = vpop.xlane.xlu0 %1422
    %v1424 = vsel %vm453, %v1336, 0.0
    %1425 = vadd.xlane.f32.xlu0 %v1424
    %v1426 = vpop.xlane.xlu0 %1425
    %v1427 = vsel %vm453, %v1337, 0.0
    %1428 = vadd.xlane.f32.xlu0 %v1427
    %v1429 = vpop.xlane.xlu0 %1428
    %v1430 = vsel %vm453, %v1338, 0.0
    %1431 = vadd.xlane.f32.xlu0 %v1430
    %v1432 = vpop.xlane.xlu0 %1431
    %v1433 = vsel %vm453, %v1339, 0.0
    %1434 = vadd.xlane.f32.xlu0 %v1433
    %v1435 = vpop.xlane.xlu0 %1434
    %v1468 = vlaneseq
    %v1469 = vshrl.u32 %v1468, 7
    %v1470 = vsub.s32 %v357, %v1469
    %v1471 = vrot.slane %v1342, %v1470
    %v1472 = vlaneseq
    %v1473 = vshrl.u32 %v1472, 7
    %v1474 = vsub.s32 %v357, %v1473
    %v1475 = vrot.slane %v1345, %v1474
    %v1476 = vlaneseq
    %v1477 = vshrl.u32 %v1476, 7
    %v1478 = vsub.s32 %v357, %v1477
    %v1479 = vrot.slane %v1348, %v1478
    %v1480 = vlaneseq
    %v1481 = vshrl.u32 %v1480, 7
    %v1482 = vsub.s32 %v357, %v1481
    %v1483 = vrot.slane %v1351, %v1482
    %v1484 = vlaneseq
    %v1485 = vshrl.u32 %v1484, 7
    %v1486 = vsub.s32 %v357, %v1485
    %v1487 = vrot.slane %v1354, %v1486
    %v1488 = vlaneseq
    %v1489 = vshrl.u32 %v1488, 7
    %v1490 = vsub.s32 %v357, %v1489
    %v1491 = vrot.slane %v1357, %v1490
    %v1492 = vlaneseq
    %v1493 = vshrl.u32 %v1492, 7
    %v1494 = vsub.s32 %v357, %v1493
    %v1495 = vrot.slane %v1360, %v1494
    %v1496 = vlaneseq
    %v1497 = vshrl.u32 %v1496, 7
    %v1498 = vsub.s32 %v357, %v1497
    %v1499 = vrot.slane %v1363, %v1498
    %v1500 = vlaneseq
    %v1501 = vshrl.u32 %v1500, 7
    %v1502 = vsub.s32 %v357, %v1501
    %v1503 = vrot.slane %v1366, %v1502
    %v1504 = vlaneseq
    %v1505 = vshrl.u32 %v1504, 7
    %v1506 = vsub.s32 %v357, %v1505
    %v1507 = vrot.slane %v1369, %v1506
    %v1508 = vlaneseq
    %v1509 = vshrl.u32 %v1508, 7
    %v1510 = vsub.s32 %v357, %v1509
    %v1511 = vrot.slane %v1372, %v1510
    %v1512 = vlaneseq
    %v1513 = vshrl.u32 %v1512, 7
    %v1514 = vsub.s32 %v357, %v1513
    %v1515 = vrot.slane %v1375, %v1514
    %v1516 = vlaneseq
    %v1517 = vshrl.u32 %v1516, 7
    %v1518 = vsub.s32 %v357, %v1517
    %v1519 = vrot.slane %v1378, %v1518
    %v1520 = vlaneseq
    %v1521 = vshrl.u32 %v1520, 7
    %v1522 = vsub.s32 %v357, %v1521
    %v1523 = vrot.slane %v1381, %v1522
    %v1524 = vlaneseq
    %v1525 = vshrl.u32 %v1524, 7
    %v1526 = vsub.s32 %v357, %v1525
    %v1527 = vrot.slane %v1384, %v1526
    %v1528 = vlaneseq
    %v1529 = vshrl.u32 %v1528, 7
    %v1530 = vsub.s32 %v357, %v1529
    %v1531 = vrot.slane %v1387, %v1530
    %v1532 = vlaneseq
    %v1533 = vshrl.u32 %v1532, 7
    %v1534 = vsub.s32 %v357, %v1533
    %v1535 = vrot.slane %v1390, %v1534
    %v1536 = vlaneseq
    %v1537 = vshrl.u32 %v1536, 7
    %v1538 = vsub.s32 %v357, %v1537
    %v1539 = vrot.slane %v1393, %v1538
    %v1540 = vlaneseq
    %v1541 = vshrl.u32 %v1540, 7
    %v1542 = vsub.s32 %v357, %v1541
    %v1543 = vrot.slane %v1396, %v1542
    %v1544 = vlaneseq
    %v1545 = vshrl.u32 %v1544, 7
    %v1546 = vsub.s32 %v357, %v1545
    %v1547 = vrot.slane %v1399, %v1546
    %v1548 = vlaneseq
    %v1549 = vshrl.u32 %v1548, 7
    %v1550 = vsub.s32 %v357, %v1549
    %v1551 = vrot.slane %v1402, %v1550
    %v1552 = vlaneseq
    %v1553 = vshrl.u32 %v1552, 7
    %v1554 = vsub.s32 %v357, %v1553
    %v1555 = vrot.slane %v1405, %v1554
    %v1556 = vlaneseq
    %v1557 = vshrl.u32 %v1556, 7
    %v1558 = vsub.s32 %v357, %v1557
    %v1559 = vrot.slane %v1408, %v1558
    %v1560 = vlaneseq
    %v1561 = vshrl.u32 %v1560, 7
    %v1562 = vsub.s32 %v357, %v1561
    %v1563 = vrot.slane %v1411, %v1562
    %v1564 = vlaneseq
    %v1565 = vshrl.u32 %v1564, 7
    %v1566 = vsub.s32 %v357, %v1565
    %v1567 = vrot.slane %v1414, %v1566
    %v1568 = vlaneseq
    %v1569 = vshrl.u32 %v1568, 7
    %v1570 = vsub.s32 %v357, %v1569
    %v1571 = vrot.slane %v1417, %v1570
    %v1572 = vlaneseq
    %v1573 = vshrl.u32 %v1572, 7
    %v1574 = vsub.s32 %v357, %v1573
    %v1575 = vrot.slane %v1420, %v1574
    %v1576 = vlaneseq
    %v1577 = vshrl.u32 %v1576, 7
    %v1578 = vsub.s32 %v357, %v1577
    %v1579 = vrot.slane %v1423, %v1578
    %v1580 = vlaneseq
    %v1581 = vshrl.u32 %v1580, 7
    %v1582 = vsub.s32 %v357, %v1581
    %v1583 = vrot.slane %v1426, %v1582
    %v1584 = vlaneseq
    %v1585 = vshrl.u32 %v1584, 7
    %v1586 = vsub.s32 %v357, %v1585
    %v1587 = vrot.slane %v1429, %v1586
    %v1588 = vlaneseq
    %v1589 = vshrl.u32 %v1588, 7
    %v1590 = vsub.s32 %v357, %v1589
    %v1591 = vrot.slane %v1432, %v1590
    %v1592 = vlaneseq
    %v1593 = vshrl.u32 %v1592, 7
    %v1594 = vsub.s32 %v357, %v1593
    %v1595 = vrot.slane %v1435, %v1594
    %v1596 = vsel %vm374, %v1475, %v1471
    %v1597 = vsel %vm375, %v1479, %v1596
    %v1598 = vsel %vm377, %v1483, %v1597
    %v1599 = vsel %vm379, %v1487, %v1598
    %v1600 = vsel %vm381, %v1491, %v1599
    %v1601 = vsel %vm383, %v1495, %v1600
    %v1602 = vsel %vm385, %v1499, %v1601
    %v1603 = vsel %vm374, %v1507, %v1503
    %v1604 = vsel %vm375, %v1511, %v1603
    %v1605 = vsel %vm377, %v1515, %v1604
    %v1606 = vsel %vm379, %v1519, %v1605
    %v1607 = vsel %vm381, %v1523, %v1606
    %v1608 = vsel %vm383, %v1527, %v1607
    %v1609 = vsel %vm385, %v1531, %v1608
    %v1610 = vsel %vm374, %v1539, %v1535
    %v1611 = vsel %vm375, %v1543, %v1610
    %v1612 = vsel %vm377, %v1547, %v1611
    %v1613 = vsel %vm379, %v1551, %v1612
    %v1614 = vsel %vm381, %v1555, %v1613
    %v1615 = vsel %vm383, %v1559, %v1614
    %v1616 = vsel %vm385, %v1563, %v1615
    %v1617 = vsel %vm374, %v1571, %v1567
    %v1618 = vsel %vm375, %v1575, %v1617
    %v1619 = vsel %vm377, %v1579, %v1618
    %v1620 = vsel %vm379, %v1583, %v1619
    %v1621 = vsel %vm381, %v1587, %v1620
    %v1622 = vsel %vm383, %v1591, %v1621
    %v1623 = vsel %vm385, %v1595, %v1622
    %v1628 = vsel %vm453, %v1602, 0.0
    %1629 = vadd.xlane.f32.xlu0 %v1628
    %v1630 = vpop.xlane.xlu0 %1629
    %v1631 = vsel %vm453, %v1609, 0.0
    %1632 = vadd.xlane.f32.xlu0 %v1631
    %v1633 = vpop.xlane.xlu0 %1632
    %v1634 = vsel %vm453, %v1616, 0.0
    %1635 = vadd.xlane.f32.xlu0 %v1634
    %v1636 = vpop.xlane.xlu0 %1635
    %v1637 = vsel %vm453, %v1623, 0.0
    %1638 = vadd.xlane.f32.xlu0 %v1637
    %v1639 = vpop.xlane.xlu0 %1638
    %v1640 = vsel %vm1276, 1, 0
    %v1641 = vsel %vm1277, 1, 0
    %v1642 = vsel %vm1278, 1, 0
    %v1643 = vsel %vm1279, 1, 0
    %v1644 = vsel %vm1280, 1, 0
    %v1645 = vsel %vm1281, 1, 0
    %v1646 = vsel %vm1282, 1, 0
    %v1647 = vsel %vm1283, 1, 0
    %v1648 = vsel %vm1284, 1, 0
    %v1649 = vsel %vm1285, 1, 0
    %v1650 = vsel %vm1286, 1, 0
    %v1651 = vsel %vm1287, 1, 0
    %v1652 = vsel %vm1288, 1, 0
    %v1653 = vsel %vm1289, 1, 0
    %v1654 = vsel %vm1290, 1, 0
    %v1655 = vsel %vm1291, 1, 0
    %v1656 = vsel %vm1292, 1, 0
    %v1657 = vsel %vm1293, 1, 0
    %v1658 = vsel %vm1294, 1, 0
    %v1659 = vsel %vm1295, 1, 0
    %v1660 = vsel %vm1296, 1, 0
    %v1661 = vsel %vm1297, 1, 0
    %v1662 = vsel %vm1298, 1, 0
    %v1663 = vsel %vm1299, 1, 0
    %v1664 = vsel %vm1300, 1, 0
    %v1665 = vsel %vm1301, 1, 0
    %v1666 = vsel %vm1302, 1, 0
    %v1667 = vsel %vm1303, 1, 0
    %v1668 = vsel %vm1304, 1, 0
    %v1669 = vsel %vm1305, 1, 0
    %v1670 = vsel %vm1306, 1, 0
    %v1671 = vsel %vm1307, 1, 0
    %v1672 = vcvt.s32.f32 %v1640
    %v1673 = vcvt.s32.f32 %v1641
    %v1674 = vcvt.s32.f32 %v1642
    %v1675 = vcvt.s32.f32 %v1643
    %v1676 = vcvt.s32.f32 %v1644
    %v1677 = vcvt.s32.f32 %v1645
    %v1678 = vcvt.s32.f32 %v1646
    %v1679 = vcvt.s32.f32 %v1647
    %v1680 = vcvt.s32.f32 %v1648
    %v1681 = vcvt.s32.f32 %v1649
    %v1682 = vcvt.s32.f32 %v1650
    %v1683 = vcvt.s32.f32 %v1651
    %v1684 = vcvt.s32.f32 %v1652
    %v1685 = vcvt.s32.f32 %v1653
    %v1686 = vcvt.s32.f32 %v1654
    %v1687 = vcvt.s32.f32 %v1655
    %v1688 = vcvt.s32.f32 %v1656
    %v1689 = vcvt.s32.f32 %v1657
    %v1690 = vcvt.s32.f32 %v1658
    %v1691 = vcvt.s32.f32 %v1659
    %v1692 = vcvt.s32.f32 %v1660
    %v1693 = vcvt.s32.f32 %v1661
    %v1694 = vcvt.s32.f32 %v1662
    %v1695 = vcvt.s32.f32 %v1663
    %v1696 = vcvt.s32.f32 %v1664
    %v1697 = vcvt.s32.f32 %v1665
    %v1698 = vcvt.s32.f32 %v1666
    %v1699 = vcvt.s32.f32 %v1667
    %v1700 = vcvt.s32.f32 %v1668
    %v1701 = vcvt.s32.f32 %v1669
    %v1702 = vcvt.s32.f32 %v1670
    %v1703 = vcvt.s32.f32 %v1671
    %v1704 = vsel %vm453, %v1672, 0.0
    %1705 = vadd.xlane.f32.xlu0 %v1704
    %v1706 = vpop.xlane.xlu0 %1705
    %v1707 = vsel %vm453, %v1673, 0.0
    %1708 = vadd.xlane.f32.xlu0 %v1707
    %v1709 = vpop.xlane.xlu0 %1708
    %v1710 = vsel %vm453, %v1674, 0.0
    %1711 = vadd.xlane.f32.xlu0 %v1710
    %v1712 = vpop.xlane.xlu0 %1711
    %v1713 = vsel %vm453, %v1675, 0.0
    %1714 = vadd.xlane.f32.xlu0 %v1713
    %v1715 = vpop.xlane.xlu0 %1714
    %v1716 = vsel %vm453, %v1676, 0.0
    %1717 = vadd.xlane.f32.xlu0 %v1716
    %v1718 = vpop.xlane.xlu0 %1717
    %v1719 = vsel %vm453, %v1677, 0.0
    %1720 = vadd.xlane.f32.xlu0 %v1719
    %v1721 = vpop.xlane.xlu0 %1720
    %v1722 = vsel %vm453, %v1678, 0.0
    %1723 = vadd.xlane.f32.xlu0 %v1722
    %v1724 = vpop.xlane.xlu0 %1723
    %v1725 = vsel %vm453, %v1679, 0.0
    %1726 = vadd.xlane.f32.xlu0 %v1725
    %v1727 = vpop.xlane.xlu0 %1726
    %v1728 = vsel %vm453, %v1680, 0.0
    %1729 = vadd.xlane.f32.xlu0 %v1728
    %v1730 = vpop.xlane.xlu0 %1729
    %v1731 = vsel %vm453, %v1681, 0.0
    %1732 = vadd.xlane.f32.xlu0 %v1731
    %v1733 = vpop.xlane.xlu0 %1732
    %v1734 = vsel %vm453, %v1682, 0.0
    %1735 = vadd.xlane.f32.xlu0 %v1734
    %v1736 = vpop.xlane.xlu0 %1735
    %v1737 = vsel %vm453, %v1683, 0.0
    %1738 = vadd.xlane.f32.xlu0 %v1737
    %v1739 = vpop.xlane.xlu0 %1738
    %v1740 = vsel %vm453, %v1684, 0.0
    %1741 = vadd.xlane.f32.xlu0 %v1740
    %v1742 = vpop.xlane.xlu0 %1741
    %v1743 = vsel %vm453, %v1685, 0.0
    %1744 = vadd.xlane.f32.xlu0 %v1743
    %v1745 = vpop.xlane.xlu0 %1744
    %v1746 = vsel %vm453, %v1686, 0.0
    %1747 = vadd.xlane.f32.xlu0 %v1746
    %v1748 = vpop.xlane.xlu0 %1747
    %v1749 = vsel %vm453, %v1687, 0.0
    %1750 = vadd.xlane.f32.xlu0 %v1749
    %v1751 = vpop.xlane.xlu0 %1750
    %v1752 = vsel %vm453, %v1688, 0.0
    %1753 = vadd.xlane.f32.xlu0 %v1752
    %v1754 = vpop.xlane.xlu0 %1753
    %v1755 = vsel %vm453, %v1689, 0.0
    %1756 = vadd.xlane.f32.xlu0 %v1755
    %v1757 = vpop.xlane.xlu0 %1756
    %v1758 = vsel %vm453, %v1690, 0.0
    %1759 = vadd.xlane.f32.xlu0 %v1758
    %v1760 = vpop.xlane.xlu0 %1759
    %v1761 = vsel %vm453, %v1691, 0.0
    %1762 = vadd.xlane.f32.xlu0 %v1761
    %v1763 = vpop.xlane.xlu0 %1762
    %v1764 = vsel %vm453, %v1692, 0.0
    %1765 = vadd.xlane.f32.xlu0 %v1764
    %v1766 = vpop.xlane.xlu0 %1765
    %v1767 = vsel %vm453, %v1693, 0.0
    %1768 = vadd.xlane.f32.xlu0 %v1767
    %v1769 = vpop.xlane.xlu0 %1768
    %v1770 = vsel %vm453, %v1694, 0.0
    %1771 = vadd.xlane.f32.xlu0 %v1770
    %v1772 = vpop.xlane.xlu0 %1771
    %v1773 = vsel %vm453, %v1695, 0.0
    %1774 = vadd.xlane.f32.xlu0 %v1773
    %v1775 = vpop.xlane.xlu0 %1774
    %v1776 = vsel %vm453, %v1696, 0.0
    %1777 = vadd.xlane.f32.xlu0 %v1776
    %v1778 = vpop.xlane.xlu0 %1777
    %v1779 = vsel %vm453, %v1697, 0.0
    %1780 = vadd.xlane.f32.xlu0 %v1779
    %v1781 = vpop.xlane.xlu0 %1780
    %v1782 = vsel %vm453, %v1698, 0.0
    %1783 = vadd.xlane.f32.xlu0 %v1782
    %v1784 = vpop.xlane.xlu0 %1783
    %v1785 = vsel %vm453, %v1699, 0.0
    %1786 = vadd.xlane.f32.xlu0 %v1785
    %v1787 = vpop.xlane.xlu0 %1786
    %v1788 = vsel %vm453, %v1700, 0.0
    %1789 = vadd.xlane.f32.xlu0 %v1788
    %v1790 = vpop.xlane.xlu0 %1789
    %v1791 = vsel %vm453, %v1701, 0.0
    %1792 = vadd.xlane.f32.xlu0 %v1791
    %v1793 = vpop.xlane.xlu0 %1792
    %v1794 = vsel %vm453, %v1702, 0.0
    %1795 = vadd.xlane.f32.xlu0 %v1794
    %v1796 = vpop.xlane.xlu0 %1795
    %v1797 = vsel %vm453, %v1703, 0.0
    %1798 = vadd.xlane.f32.xlu0 %v1797
    %v1799 = vpop.xlane.xlu0 %1798
    %v1832 = vlaneseq
    %v1833 = vshrl.u32 %v1832, 7
    %v1834 = vsub.s32 %v357, %v1833
    %v1835 = vrot.slane %v1706, %v1834
    %v1836 = vlaneseq
    %v1837 = vshrl.u32 %v1836, 7
    %v1838 = vsub.s32 %v357, %v1837
    %v1839 = vrot.slane %v1709, %v1838
    %v1840 = vlaneseq
    %v1841 = vshrl.u32 %v1840, 7
    %v1842 = vsub.s32 %v357, %v1841
    %v1843 = vrot.slane %v1712, %v1842
    %v1844 = vlaneseq
    %v1845 = vshrl.u32 %v1844, 7
    %v1846 = vsub.s32 %v357, %v1845
    %v1847 = vrot.slane %v1715, %v1846
    %v1848 = vlaneseq
    %v1849 = vshrl.u32 %v1848, 7
    %v1850 = vsub.s32 %v357, %v1849
    %v1851 = vrot.slane %v1718, %v1850
    %v1852 = vlaneseq
    %v1853 = vshrl.u32 %v1852, 7
    %v1854 = vsub.s32 %v357, %v1853
    %v1855 = vrot.slane %v1721, %v1854
    %v1856 = vlaneseq
    %v1857 = vshrl.u32 %v1856, 7
    %v1858 = vsub.s32 %v357, %v1857
    %v1859 = vrot.slane %v1724, %v1858
    %v1860 = vlaneseq
    %v1861 = vshrl.u32 %v1860, 7
    %v1862 = vsub.s32 %v357, %v1861
    %v1863 = vrot.slane %v1727, %v1862
    %v1864 = vlaneseq
    %v1865 = vshrl.u32 %v1864, 7
    %v1866 = vsub.s32 %v357, %v1865
    %v1867 = vrot.slane %v1730, %v1866
    %v1868 = vlaneseq
    %v1869 = vshrl.u32 %v1868, 7
    %v1870 = vsub.s32 %v357, %v1869
    %v1871 = vrot.slane %v1733, %v1870
    %v1872 = vlaneseq
    %v1873 = vshrl.u32 %v1872, 7
    %v1874 = vsub.s32 %v357, %v1873
    %v1875 = vrot.slane %v1736, %v1874
    %v1876 = vlaneseq
    %v1877 = vshrl.u32 %v1876, 7
    %v1878 = vsub.s32 %v357, %v1877
    %v1879 = vrot.slane %v1739, %v1878
    %v1880 = vlaneseq
    %v1881 = vshrl.u32 %v1880, 7
    %v1882 = vsub.s32 %v357, %v1881
    %v1883 = vrot.slane %v1742, %v1882
    %v1884 = vlaneseq
    %v1885 = vshrl.u32 %v1884, 7
    %v1886 = vsub.s32 %v357, %v1885
    %v1887 = vrot.slane %v1745, %v1886
    %v1888 = vlaneseq
    %v1889 = vshrl.u32 %v1888, 7
    %v1890 = vsub.s32 %v357, %v1889
    %v1891 = vrot.slane %v1748, %v1890
    %v1892 = vlaneseq
    %v1893 = vshrl.u32 %v1892, 7
    %v1894 = vsub.s32 %v357, %v1893
    %v1895 = vrot.slane %v1751, %v1894
    %v1896 = vlaneseq
    %v1897 = vshrl.u32 %v1896, 7
    %v1898 = vsub.s32 %v357, %v1897
    %v1899 = vrot.slane %v1754, %v1898
    %v1900 = vlaneseq
    %v1901 = vshrl.u32 %v1900, 7
    %v1902 = vsub.s32 %v357, %v1901
    %v1903 = vrot.slane %v1757, %v1902
    %v1904 = vlaneseq
    %v1905 = vshrl.u32 %v1904, 7
    %v1906 = vsub.s32 %v357, %v1905
    %v1907 = vrot.slane %v1760, %v1906
    %v1908 = vlaneseq
    %v1909 = vshrl.u32 %v1908, 7
    %v1910 = vsub.s32 %v357, %v1909
    %v1911 = vrot.slane %v1763, %v1910
    %v1912 = vlaneseq
    %v1913 = vshrl.u32 %v1912, 7
    %v1914 = vsub.s32 %v357, %v1913
    %v1915 = vrot.slane %v1766, %v1914
    %v1916 = vlaneseq
    %v1917 = vshrl.u32 %v1916, 7
    %v1918 = vsub.s32 %v357, %v1917
    %v1919 = vrot.slane %v1769, %v1918
    %v1920 = vlaneseq
    %v1921 = vshrl.u32 %v1920, 7
    %v1922 = vsub.s32 %v357, %v1921
    %v1923 = vrot.slane %v1772, %v1922
    %v1924 = vlaneseq
    %v1925 = vshrl.u32 %v1924, 7
    %v1926 = vsub.s32 %v357, %v1925
    %v1927 = vrot.slane %v1775, %v1926
    %v1928 = vlaneseq
    %v1929 = vshrl.u32 %v1928, 7
    %v1930 = vsub.s32 %v357, %v1929
    %v1931 = vrot.slane %v1778, %v1930
    %v1932 = vlaneseq
    %v1933 = vshrl.u32 %v1932, 7
    %v1934 = vsub.s32 %v357, %v1933
    %v1935 = vrot.slane %v1781, %v1934
    %v1936 = vlaneseq
    %v1937 = vshrl.u32 %v1936, 7
    %v1938 = vsub.s32 %v357, %v1937
    %v1939 = vrot.slane %v1784, %v1938
    %v1940 = vlaneseq
    %v1941 = vshrl.u32 %v1940, 7
    %v1942 = vsub.s32 %v357, %v1941
    %v1943 = vrot.slane %v1787, %v1942
    %v1944 = vlaneseq
    %v1945 = vshrl.u32 %v1944, 7
    %v1946 = vsub.s32 %v357, %v1945
    %v1947 = vrot.slane %v1790, %v1946
    %v1948 = vlaneseq
    %v1949 = vshrl.u32 %v1948, 7
    %v1950 = vsub.s32 %v357, %v1949
    %v1951 = vrot.slane %v1793, %v1950
    %v1952 = vlaneseq
    %v1953 = vshrl.u32 %v1952, 7
    %v1954 = vsub.s32 %v357, %v1953
    %v1955 = vrot.slane %v1796, %v1954
    %v1956 = vlaneseq
    %v1957 = vshrl.u32 %v1956, 7
    %v1958 = vsub.s32 %v357, %v1957
    %v1959 = vrot.slane %v1799, %v1958
    %v1960 = vsel %vm374, %v1839, %v1835
    %v1961 = vsel %vm375, %v1843, %v1960
    %v1962 = vsel %vm377, %v1847, %v1961
    %v1963 = vsel %vm379, %v1851, %v1962
    %v1964 = vsel %vm381, %v1855, %v1963
    %v1965 = vsel %vm383, %v1859, %v1964
    %v1966 = vsel %vm385, %v1863, %v1965
    %v1967 = vsel %vm374, %v1871, %v1867
    %v1968 = vsel %vm375, %v1875, %v1967
    %v1969 = vsel %vm377, %v1879, %v1968
    %v1970 = vsel %vm379, %v1883, %v1969
    %v1971 = vsel %vm381, %v1887, %v1970
    %v1972 = vsel %vm383, %v1891, %v1971
    %v1973 = vsel %vm385, %v1895, %v1972
    %v1974 = vsel %vm374, %v1903, %v1899
    %v1975 = vsel %vm375, %v1907, %v1974
    %v1976 = vsel %vm377, %v1911, %v1975
    %v1977 = vsel %vm379, %v1915, %v1976
    %v1978 = vsel %vm381, %v1919, %v1977
    %v1979 = vsel %vm383, %v1923, %v1978
    %v1980 = vsel %vm385, %v1927, %v1979
    %v1981 = vsel %vm374, %v1935, %v1931
    %v1982 = vsel %vm375, %v1939, %v1981
    %v1983 = vsel %vm377, %v1943, %v1982
    %v1984 = vsel %vm379, %v1947, %v1983
    %v1985 = vsel %vm381, %v1951, %v1984
    %v1986 = vsel %vm383, %v1955, %v1985
    %v1987 = vsel %vm385, %v1959, %v1986
    %v1992 = vsel %vm453, %v1966, 0.0
    %1993 = vadd.xlane.f32.xlu0 %v1992
    %v1994 = vpop.xlane.xlu0 %1993
    %v1995 = vsel %vm453, %v1973, 0.0
    %1996 = vadd.xlane.f32.xlu0 %v1995
    %v1997 = vpop.xlane.xlu0 %1996
    %v1998 = vsel %vm453, %v1980, 0.0
    %1999 = vadd.xlane.f32.xlu0 %v1998
    %v2000 = vpop.xlane.xlu0 %1999
    %v2001 = vsel %vm453, %v1987, 0.0
    %2002 = vadd.xlane.f32.xlu0 %v2001
    %v2003 = vpop.xlane.xlu0 %2002
    %v2008 = vlaneseq
    %v2009 = vshrl.u32 %v2008, 7
    %v2010 = vsub.s32 %v357, %v2009
    %v2011 = vrot.slane %v1630, %v2010
    %v2012 = vlaneseq
    %v2013 = vshrl.u32 %v2012, 7
    %v2014 = vsub.s32 %v357, %v2013
    %v2015 = vrot.slane %v1633, %v2014
    %v2016 = vlaneseq
    %v2017 = vshrl.u32 %v2016, 7
    %v2018 = vsub.s32 %v357, %v2017
    %v2019 = vrot.slane %v1636, %v2018
    %v2020 = vlaneseq
    %v2021 = vshrl.u32 %v2020, 7
    %v2022 = vsub.s32 %v357, %v2021
    %v2023 = vrot.slane %v1639, %v2022
    %v2024 = vsel %vm374, %v2015, %v2011
    %v2025 = vsel %vm375, %v2019, %v2024
    %v2026 = vsel %vm377, %v2023, %v2025
    %v2028 = vsel %vm495, %v2026, 0.0
    %2029 = vadd.xlane.f32.xlu0 %v2028
    %v2030 = vpop.xlane.xlu0 %2029
    %v2031 = vadd.f32 %v2030, 0.0
    %v2036 = vlaneseq
    %v2037 = vshrl.u32 %v2036, 7
    %v2038 = vsub.s32 %v357, %v2037
    %v2039 = vrot.slane %v1994, %v2038
    %v2040 = vlaneseq
    %v2041 = vshrl.u32 %v2040, 7
    %v2042 = vsub.s32 %v357, %v2041
    %v2043 = vrot.slane %v1997, %v2042
    %v2044 = vlaneseq
    %v2045 = vshrl.u32 %v2044, 7
    %v2046 = vsub.s32 %v357, %v2045
    %v2047 = vrot.slane %v2000, %v2046
    %v2048 = vlaneseq
    %v2049 = vshrl.u32 %v2048, 7
    %v2050 = vsub.s32 %v357, %v2049
    %v2051 = vrot.slane %v2003, %v2050
    %v2052 = vsel %vm374, %v2043, %v2039
    %v2053 = vsel %vm375, %v2047, %v2052
    %v2054 = vsel %vm377, %v2051, %v2053
    %v2056 = vsel %vm495, %v2054, 0.0
    %2057 = vadd.xlane.f32.xlu0 %v2056
    %v2058 = vpop.xlane.xlu0 %2057
    %v2059 = vadd.f32 %v2058, 0.0
    %vm2060 = vcmp.eq.f32.partialorder %v2059, 0.0
    %v2061 = vmax.f32 %v2059, 1.0
    %v2062 = vrcp.pop %v2061
    %v2063 = vmul.f32 %v2031, %v2062
    %v2064 = vsel %vm2060, 0.0, %v2063
    %vm2065 = vcmask 7168
    %v2066 = vsel %vm2065, %v2064, %v643
    %vm2067 = vcmask 15360
    %v2068 = vsel %vm2067, %v2066, %v499
    %vm2069 = vcmask 23552
    %v2070 = vsel %vm2069, %v2068, %v2059
    %vm2071 = vcmask 27648
    %2072 = vst.msk [vmem:[#allocation9] sm:$0xf] %vm2071, %v2070
    // Predicated region
    $region18: #{tpu_custom_call.1} parent=1 // pred_check
      _
    $region19: #{tpu_custom_call.1} parent=1 // pred_check_branch
      %2074 = sbr.rel (0) target = $region21
    $region20: #{tpu_custom_call.1} parent=1 // pred_region
      %s2076 = ssub.s32 64, 64
      %2077 = vsyncadd [#allocation6], %s2076
      %s2079 = sshll.u32 [#allocation9], 4
      %s2080 = int_to_ptr.vmem [resolvable:$true] %s2079
      %2082 = dma.vmem_to_hbm [thread:$0]  %s2080, 64, %s2, [#allocation6]
    $region21: #{tpu_custom_call.1} parent=1 // pred_fallthru
      _
    // Predicated region
    $region22: #{tpu_custom_call.1} parent=1 // pred_check
      _
    $region23: #{tpu_custom_call.1} parent=1 // pred_check_branch
      %2084 = sbr.rel (0) target = $region25
    $region24: #{tpu_custom_call.1} parent=1 // pred_region
      %2085 = dma.done [#allocation6], 64
    $region25: #{tpu_custom_call.1} parent=1 // pred_fallthru
      _
    %2086 = vsyncpa [#allocation5], 1
    %2087 = vsyncpa [#allocation8], 1
    %2088 = vsyncpa [#allocation6], 1

</llo_original>
